<compile_context>
chip_gen: v6e
topology: v6e:2x2x1
jax: 0.10.0
libtpu: 0.0.40
codegen_flags: <defaults>
</compile_context>

<pallas_src>
import functools
import math

import jax
import jax.numpy as jnp
from jax.experimental import pallas as pl
from jax.experimental.pallas import tpu as pltpu


def _attn_kernel(x_ref, wq_ref, wk_ref, wv_ref, bq_ref, bk_ref, bv_ref,
                 mask_ref, o_ref, *, head_dim, heads_per_block):
    # x_ref    : (1, S, H)     one batch's hidden states (resident across hb)
    # w*_ref   : (H, HB*D)     pre-transposed projection weights for HB heads
    # b*_ref   : (1, HB*D)     grouped bias (single lane-dense add)
    # mask_ref : (1, 1, 1, S)  additive attention mask for this batch
    # o_ref    : (1, S, HB*D)  slice of the (B, S, H) output slab
    x = x_ref[0]                                   # (S, H)
    in_dtype = x.dtype
    scale = 1.0 / math.sqrt(head_dim)

    # Grouped projections: N = HB*D lanes per MXU matmul, f32 accumulation.
    q = jnp.dot(x, wq_ref[...], preferred_element_type=jnp.float32) + bq_ref[...]
    k = jnp.dot(x, wk_ref[...], preferred_element_type=jnp.float32) + bk_ref[...]
    v = jnp.dot(x, wv_ref[...], preferred_element_type=jnp.float32) + bv_ref[...]

    # Fold the softmax scale into q (S*HB*D mults instead of S*S per head).
    q = q * scale

    # Cast back to the input dtype for the attention matmuls (full-rate MXU
    # for bf16 models; a no-op for f32 inputs).
    q = q.astype(in_dtype)
    k = k.astype(in_dtype)
    v = v.astype(in_dtype)

    mask = mask_ref[0, 0]                          # (1, S), broadcasts over rows

    parts = []
    for h in range(heads_per_block):               # small static loop (<= 4)
        lo = h * head_dim
        qh = q[:, lo:lo + head_dim]                # (S, D)
        kh = k[:, lo:lo + head_dim]                # (S, D)
        vh = v[:, lo:lo + head_dim]                # (S, D)

        # q @ k^T without an in-kernel transpose: contract the D axes.
        s = jax.lax.dot_general(qh, kh, (((1,), (1,)), ((), ())),
                                preferred_element_type=jnp.float32)   # (S, S)
        s = s + mask

        # Numerically stable softmax; reciprocal goes to the EUP slot.
        m = jnp.max(s, axis=-1, keepdims=True)
        p = jnp.exp(s - m)
        p = p * pl.reciprocal(jnp.sum(p, axis=-1, keepdims=True), approx=True)

        # TODO(synk): attention_probs dropout omitted (eval mode == identity).
        ctx_h = jnp.dot(p.astype(in_dtype), vh,
                        preferred_element_type=jnp.float32)           # (S, D)
        parts.append(ctx_h)

    ctx = parts[0] if len(parts) == 1 else jnp.concatenate(parts, axis=-1)
    o_ref[0] = ctx.astype(o_ref.dtype)             # lane-dense (S, HB*D) store


def _pick_heads_per_block(num_heads, head_dim, target_lanes=256):
    # Aim for >=128-256 output lanes per grid step (2 heads at D=64 on v5e,
    # 4 heads at D=64 on v6e/v7x), while dividing num_heads evenly.
    hb = max(1, min(num_heads, target_lanes // max(head_dim, 1)))
    while num_heads % hb:
        hb -= 1
    return hb


def bert_self_attention(hidden_states, attention_mask, params, num_heads,
                        head_dim, heads_per_block=None):
    """hidden_states: [B, S, H]; attention_mask: [B, 1, 1, S] (additive)."""
    B, S, H = hidden_states.shape
    assert H == num_heads * head_dim

    if heads_per_block is None:
        heads_per_block = _pick_heads_per_block(num_heads, head_dim)
    assert num_heads % heads_per_block == 0
    n_blocks = num_heads // heads_per_block
    hbd = heads_per_block * head_dim

    # nn.Linear stores W as [out, in]; pre-transpose host-side to [in, out] so
    # the kernel contracts H directly with no XLU transpose.
    wq_t = params["wq"].T
    wk_t = params["wk"].T
    wv_t = params["wv"].T
    bq = params["bq"].reshape(1, H)
    bk = params["bk"].reshape(1, H)
    bv = params["bv"].reshape(1, H)

    kernel = functools.partial(_attn_kernel, head_dim=head_dim,
                               heads_per_block=heads_per_block)

    w_spec = pl.BlockSpec((H, hbd), lambda b, hb: (0, hb))
    b_spec = pl.BlockSpec((1, hbd), lambda b, hb: (0, hb))

    out = pl.pallas_call(
        kernel,
        out_shape=jax.ShapeDtypeStruct((B, S, H), hidden_states.dtype),
        grid=(B, n_blocks),        # batch outer, head-block inner -> x resident
        in_specs=[
            pl.BlockSpec((1, S, H), lambda b, hb: (b, 0, 0)),        # x
            w_spec, w_spec, w_spec,                                   # wq wk wv
            b_spec, b_spec, b_spec,                                   # bq bk bv
            pl.BlockSpec((1, 1, 1, S), lambda b, hb: (b, 0, 0, 0)),   # mask
        ],
        out_specs=pl.BlockSpec((1, S, hbd), lambda b, hb: (b, 0, hb)),
        compiler_params=pltpu.CompilerParams(
            dimension_semantics=("parallel", "arbitrary"),
            vmem_limit_bytes=64 * 1024 * 1024),
    )(hidden_states, wq_t, wk_t, wv_t, bq, bk, bv, attention_mask)

    # TODO(synk): for v7x (64 MiB VMEM) at S >= ~1-2K, add a query-tile grid
    # axis (per-tile exact softmax against the full K) to cap the (S, S)
    # scores intermediate; monolithic-S design is kept for v5e/v6e.
    return out


def _reference(hidden_states, attention_mask, params, num_heads, head_dim):
    B, S, H = hidden_states.shape

    def lin(x, w, b):
        return x @ w.T + b

    q = lin(hidden_states, params["wq"], params["bq"])
    k = lin(hidden_states, params["wk"], params["bk"])
    v = lin(hidden_states, params["wv"], params["bv"])

    def split(x):
        return jnp.transpose(x.reshape(B, S, num_heads, head_dim), (0, 2, 1, 3))

    q, k, v = split(q), split(k), split(v)
    s = jnp.einsum("bhqd,bhkd->bhqk", q, k) / math.sqrt(head_dim)
    s = s + attention_mask
    p = jax.nn.softmax(s, axis=-1)
    ctx = jnp.einsum("bhqk,bhkd->bhqd", p, v)
    return jnp.transpose(ctx, (0, 2, 1, 3)).reshape(B, S, H)


if __name__ == "__main__":
    B, S, H = 2, 8, 32
    NUM_HEADS = 4
    HEAD_DIM = H // NUM_HEADS

    key = jax.random.PRNGKey(0)
    ks = jax.random.split(key, 8)
    scale = 1.0 / math.sqrt(H)
    params = {
        "wq": jax.random.normal(ks[0], (H, H), jnp.float32) * scale,
        "bq": jax.random.normal(ks[1], (H,), jnp.float32) * 0.02,
        "wk": jax.random.normal(ks[2], (H, H), jnp.float32) * scale,
        "bk": jax.random.normal(ks[3], (H,), jnp.float32) * 0.02,
        "wv": jax.random.normal(ks[4], (H, H), jnp.float32) * scale,
        "bv": jax.random.normal(ks[5], (H,), jnp.float32) * 0.02,
    }
    hidden_states = jax.random.normal(ks[6], (B, S, H), jnp.float32)
    # BERT-style additive mask: 0 for attend, -10000 for masked positions.
    mask_bits = (jax.random.uniform(ks[7], (B, 1, 1, S)) > 0.25).astype(jnp.float32)
    attention_mask = (1.0 - mask_bits) * -10000.0

    out = bert_self_attention(hidden_states, attention_mask, params,
                              NUM_HEADS, HEAD_DIM)
    out = jax.block_until_ready(out)

    ref = _reference(hidden_states, attention_mask, params, NUM_HEADS, HEAD_DIM)
    assert out.shape == (B, S, H)
    # Tolerance loosened slightly for pl.reciprocal(approx=True).
    assert jnp.allclose(out, ref, atol=1e-2, rtol=1e-2), "mismatch vs reference"

    print("KERNEL_OK")
</pallas_src>

<mosaic_0001>
module attributes {stable_mosaic.version = 11 : i64} {
  func.func @_attn_kernel(%arg0: i32, %arg1: i32, %arg2: memref<1x8x32xf32, #tpu.memory_space<vmem>>, %arg3: memref<32x32xf32, #tpu.memory_space<vmem>>, %arg4: memref<32x32xf32, #tpu.memory_space<vmem>>, %arg5: memref<32x32xf32, #tpu.memory_space<vmem>>, %arg6: memref<1x32xf32, #tpu.memory_space<vmem>>, %arg7: memref<1x32xf32, #tpu.memory_space<vmem>>, %arg8: memref<1x32xf32, #tpu.memory_space<vmem>>, %arg9: memref<1x1x1x8xf32, #tpu.memory_space<vmem>>, %arg10: memref<1x8x32xf32, #tpu.memory_space<vmem>>) attributes {dimension_semantics = [#tpu.dimension_semantics<parallel>, #tpu.dimension_semantics<arbitrary>], iteration_bounds = array<i64: 2, 1>, scalar_prefetch = 0 : i64, scratch_operands = 0 : i64, tpu.core_type = #tpu.core_type<tc>, window_params = [{transform_indices = @transform_0, window_bounds = array<i64: 1, 8, 32>}, {transform_indices = @transform_1, window_bounds = array<i64: 32, 32>}, {transform_indices = @transform_2, window_bounds = array<i64: 32, 32>}, {transform_indices = @transform_3, window_bounds = array<i64: 32, 32>}, {transform_indices = @transform_4, window_bounds = array<i64: 1, 32>}, {transform_indices = @transform_5, window_bounds = array<i64: 1, 32>}, {transform_indices = @transform_6, window_bounds = array<i64: 1, 32>}, {transform_indices = @transform_7, window_bounds = array<i64: 1, 1, 1, 8>}, {transform_indices = @transform_8, window_bounds = array<i64: 1, 8, 32>}]} {
    %c0 = arith.constant 0 : index
    %c0_0 = arith.constant 0 : index
    %c0_1 = arith.constant 0 : index
    %0 = vector.load %arg2[%c0, %c0_0, %c0_1] : memref<1x8x32xf32, #tpu.memory_space<vmem>>, vector<1x8x32xf32>
    %1 = vector.shape_cast %0 : vector<1x8x32xf32> to vector<8x32xf32>
    %c0_2 = arith.constant 0 : index
    %c0_3 = arith.constant 0 : index
    %2 = vector.load %arg3[%c0_2, %c0_3] : memref<32x32xf32, #tpu.memory_space<vmem>>, vector<32x32xf32>
    %cst = arith.constant dense<0.000000e+00> : vector<8x32xf32>
    %3 = tpu.matmul %1, %2, %cst {dimension_numbers = #tpu.dot_dimension_numbers<[1], [0], [0], [1], [0, 0, 1, 1], [], []>} : vector<8x32xf32>, vector<32x32xf32>, vector<8x32xf32> -> vector<8x32xf32>
    %c0_4 = arith.constant 0 : index
    %c0_5 = arith.constant 0 : index
    %4 = vector.load %arg6[%c0_4, %c0_5] : memref<1x32xf32, #tpu.memory_space<vmem>>, vector<1x32xf32>
    %5 = vector.broadcast %4 : vector<1x32xf32> to vector<8x32xf32>
    %6 = arith.addf %3, %5 : vector<8x32xf32>
    %c0_6 = arith.constant 0 : index
    %c0_7 = arith.constant 0 : index
    %7 = vector.load %arg4[%c0_6, %c0_7] : memref<32x32xf32, #tpu.memory_space<vmem>>, vector<32x32xf32>
    %cst_8 = arith.constant dense<0.000000e+00> : vector<8x32xf32>
    %8 = tpu.matmul %1, %7, %cst_8 {dimension_numbers = #tpu.dot_dimension_numbers<[1], [0], [0], [1], [0, 0, 1, 1], [], []>} : vector<8x32xf32>, vector<32x32xf32>, vector<8x32xf32> -> vector<8x32xf32>
    %c0_9 = arith.constant 0 : index
    %c0_10 = arith.constant 0 : index
    %9 = vector.load %arg7[%c0_9, %c0_10] : memref<1x32xf32, #tpu.memory_space<vmem>>, vector<1x32xf32>
    %10 = vector.broadcast %9 : vector<1x32xf32> to vector<8x32xf32>
    %11 = arith.addf %8, %10 : vector<8x32xf32>
    %c0_11 = arith.constant 0 : index
    %c0_12 = arith.constant 0 : index
    %12 = vector.load %arg5[%c0_11, %c0_12] : memref<32x32xf32, #tpu.memory_space<vmem>>, vector<32x32xf32>
    %cst_13 = arith.constant dense<0.000000e+00> : vector<8x32xf32>
    %13 = tpu.matmul %1, %12, %cst_13 {dimension_numbers = #tpu.dot_dimension_numbers<[1], [0], [0], [1], [0, 0, 1, 1], [], []>} : vector<8x32xf32>, vector<32x32xf32>, vector<8x32xf32> -> vector<8x32xf32>
    %c0_14 = arith.constant 0 : index
    %c0_15 = arith.constant 0 : index
    %14 = vector.load %arg8[%c0_14, %c0_15] : memref<1x32xf32, #tpu.memory_space<vmem>>, vector<1x32xf32>
    %15 = vector.broadcast %14 : vector<1x32xf32> to vector<8x32xf32>
    %16 = arith.addf %13, %15 : vector<8x32xf32>
    %cst_16 = arith.constant 0.353553385 : f32
    %17 = vector.broadcast %cst_16 : f32 to vector<8x32xf32>
    %18 = arith.mulf %6, %17 : vector<8x32xf32>
    %c0_17 = arith.constant 0 : index
    %c0_18 = arith.constant 0 : index
    %c0_19 = arith.constant 0 : index
    %c0_20 = arith.constant 0 : index
    %19 = vector.load %arg9[%c0_17, %c0_18, %c0_19, %c0_20] : memref<1x1x1x8xf32, #tpu.memory_space<vmem>>, vector<1x1x1x8xf32>
    %20 = vector.shape_cast %19 : vector<1x1x1x8xf32> to vector<1x8xf32>
    %21 = vector.extract_strided_slice %18 {offsets = [0, 0], sizes = [8, 8], strides = [1, 1]} : vector<8x32xf32> to vector<8x8xf32>
    %22 = vector.extract_strided_slice %11 {offsets = [0, 0], sizes = [8, 8], strides = [1, 1]} : vector<8x32xf32> to vector<8x8xf32>
    %23 = vector.extract_strided_slice %16 {offsets = [0, 0], sizes = [8, 8], strides = [1, 1]} : vector<8x32xf32> to vector<8x8xf32>
    %cst_21 = arith.constant dense<0.000000e+00> : vector<8x8xf32>
    %24 = tpu.matmul %21, %22, %cst_21 {dimension_numbers = #tpu.dot_dimension_numbers<[1], [1], [0], [0], [0, 0, 1, 0], [], []>} : vector<8x8xf32>, vector<8x8xf32>, vector<8x8xf32> -> vector<8x8xf32>
    %25 = vector.broadcast %20 : vector<1x8xf32> to vector<8x8xf32>
    %26 = arith.addf %24, %25 : vector<8x8xf32>
    %cst_22 = arith.constant dense<0xFF800000> : vector<8xf32>
    %27 = vector.multi_reduction <maximumf>, %26, %cst_22 [1] : vector<8x8xf32> to vector<8xf32>
    %28 = vector.shape_cast %27 : vector<8xf32> to vector<8x1xf32>
    %29 = vector.broadcast %28 : vector<8x1xf32> to vector<8x8xf32>
    %30 = arith.subf %26, %29 : vector<8x8xf32>
    %31 = math.exp %30 : vector<8x8xf32>
    %cst_23 = arith.constant dense<0.000000e+00> : vector<8xf32>
    %32 = vector.multi_reduction <add>, %31, %cst_23 [1] : vector<8x8xf32> to vector<8xf32>
    %33 = vector.shape_cast %32 : vector<8xf32> to vector<8x1xf32>
    %34 = tpu.reciprocal %33 {approx = true} : vector<8x1xf32> -> vector<8x1xf32>
    %35 = vector.broadcast %34 : vector<8x1xf32> to vector<8x8xf32>
    %36 = arith.mulf %31, %35 : vector<8x8xf32>
    %cst_24 = arith.constant dense<0.000000e+00> : vector<8x8xf32>
    %37 = tpu.matmul %36, %23, %cst_24 {dimension_numbers = #tpu.dot_dimension_numbers<[1], [0], [0], [1], [0, 0, 1, 1], [], []>} : vector<8x8xf32>, vector<8x8xf32>, vector<8x8xf32> -> vector<8x8xf32>
    %38 = vector.extract_strided_slice %18 {offsets = [0, 8], sizes = [8, 8], strides = [1, 1]} : vector<8x32xf32> to vector<8x8xf32>
    %39 = vector.extract_strided_slice %11 {offsets = [0, 8], sizes = [8, 8], strides = [1, 1]} : vector<8x32xf32> to vector<8x8xf32>
    %40 = vector.extract_strided_slice %16 {offsets = [0, 8], sizes = [8, 8], strides = [1, 1]} : vector<8x32xf32> to vector<8x8xf32>
    %cst_25 = arith.constant dense<0.000000e+00> : vector<8x8xf32>
    %41 = tpu.matmul %38, %39, %cst_25 {dimension_numbers = #tpu.dot_dimension_numbers<[1], [1], [0], [0], [0, 0, 1, 0], [], []>} : vector<8x8xf32>, vector<8x8xf32>, vector<8x8xf32> -> vector<8x8xf32>
    %42 = vector.broadcast %20 : vector<1x8xf32> to vector<8x8xf32>
    %43 = arith.addf %41, %42 : vector<8x8xf32>
    %cst_26 = arith.constant dense<0xFF800000> : vector<8xf32>
    %44 = vector.multi_reduction <maximumf>, %43, %cst_26 [1] : vector<8x8xf32> to vector<8xf32>
    %45 = vector.shape_cast %44 : vector<8xf32> to vector<8x1xf32>
    %46 = vector.broadcast %45 : vector<8x1xf32> to vector<8x8xf32>
    %47 = arith.subf %43, %46 : vector<8x8xf32>
    %48 = math.exp %47 : vector<8x8xf32>
    %cst_27 = arith.constant dense<0.000000e+00> : vector<8xf32>
    %49 = vector.multi_reduction <add>, %48, %cst_27 [1] : vector<8x8xf32> to vector<8xf32>
    %50 = vector.shape_cast %49 : vector<8xf32> to vector<8x1xf32>
    %51 = tpu.reciprocal %50 {approx = true} : vector<8x1xf32> -> vector<8x1xf32>
    %52 = vector.broadcast %51 : vector<8x1xf32> to vector<8x8xf32>
    %53 = arith.mulf %48, %52 : vector<8x8xf32>
    %cst_28 = arith.constant dense<0.000000e+00> : vector<8x8xf32>
    %54 = tpu.matmul %53, %40, %cst_28 {dimension_numbers = #tpu.dot_dimension_numbers<[1], [0], [0], [1], [0, 0, 1, 1], [], []>} : vector<8x8xf32>, vector<8x8xf32>, vector<8x8xf32> -> vector<8x8xf32>
    %55 = vector.extract_strided_slice %18 {offsets = [0, 16], sizes = [8, 8], strides = [1, 1]} : vector<8x32xf32> to vector<8x8xf32>
    %56 = vector.extract_strided_slice %11 {offsets = [0, 16], sizes = [8, 8], strides = [1, 1]} : vector<8x32xf32> to vector<8x8xf32>
    %57 = vector.extract_strided_slice %16 {offsets = [0, 16], sizes = [8, 8], strides = [1, 1]} : vector<8x32xf32> to vector<8x8xf32>
    %cst_29 = arith.constant dense<0.000000e+00> : vector<8x8xf32>
    %58 = tpu.matmul %55, %56, %cst_29 {dimension_numbers = #tpu.dot_dimension_numbers<[1], [1], [0], [0], [0, 0, 1, 0], [], []>} : vector<8x8xf32>, vector<8x8xf32>, vector<8x8xf32> -> vector<8x8xf32>
    %59 = vector.broadcast %20 : vector<1x8xf32> to vector<8x8xf32>
    %60 = arith.addf %58, %59 : vector<8x8xf32>
    %cst_30 = arith.constant dense<0xFF800000> : vector<8xf32>
    %61 = vector.multi_reduction <maximumf>, %60, %cst_30 [1] : vector<8x8xf32> to vector<8xf32>
    %62 = vector.shape_cast %61 : vector<8xf32> to vector<8x1xf32>
    %63 = vector.broadcast %62 : vector<8x1xf32> to vector<8x8xf32>
    %64 = arith.subf %60, %63 : vector<8x8xf32>
    %65 = math.exp %64 : vector<8x8xf32>
    %cst_31 = arith.constant dense<0.000000e+00> : vector<8xf32>
    %66 = vector.multi_reduction <add>, %65, %cst_31 [1] : vector<8x8xf32> to vector<8xf32>
    %67 = vector.shape_cast %66 : vector<8xf32> to vector<8x1xf32>
    %68 = tpu.reciprocal %67 {approx = true} : vector<8x1xf32> -> vector<8x1xf32>
    %69 = vector.broadcast %68 : vector<8x1xf32> to vector<8x8xf32>
    %70 = arith.mulf %65, %69 : vector<8x8xf32>
    %cst_32 = arith.constant dense<0.000000e+00> : vector<8x8xf32>
    %71 = tpu.matmul %70, %57, %cst_32 {dimension_numbers = #tpu.dot_dimension_numbers<[1], [0], [0], [1], [0, 0, 1, 1], [], []>} : vector<8x8xf32>, vector<8x8xf32>, vector<8x8xf32> -> vector<8x8xf32>
    %72 = vector.extract_strided_slice %18 {offsets = [0, 24], sizes = [8, 8], strides = [1, 1]} : vector<8x32xf32> to vector<8x8xf32>
    %73 = vector.extract_strided_slice %11 {offsets = [0, 24], sizes = [8, 8], strides = [1, 1]} : vector<8x32xf32> to vector<8x8xf32>
    %74 = vector.extract_strided_slice %16 {offsets = [0, 24], sizes = [8, 8], strides = [1, 1]} : vector<8x32xf32> to vector<8x8xf32>
    %cst_33 = arith.constant dense<0.000000e+00> : vector<8x8xf32>
    %75 = tpu.matmul %72, %73, %cst_33 {dimension_numbers = #tpu.dot_dimension_numbers<[1], [1], [0], [0], [0, 0, 1, 0], [], []>} : vector<8x8xf32>, vector<8x8xf32>, vector<8x8xf32> -> vector<8x8xf32>
    %76 = vector.broadcast %20 : vector<1x8xf32> to vector<8x8xf32>
    %77 = arith.addf %75, %76 : vector<8x8xf32>
    %cst_34 = arith.constant dense<0xFF800000> : vector<8xf32>
    %78 = vector.multi_reduction <maximumf>, %77, %cst_34 [1] : vector<8x8xf32> to vector<8xf32>
    %79 = vector.shape_cast %78 : vector<8xf32> to vector<8x1xf32>
    %80 = vector.broadcast %79 : vector<8x1xf32> to vector<8x8xf32>
    %81 = arith.subf %77, %80 : vector<8x8xf32>
    %82 = math.exp %81 : vector<8x8xf32>
    %cst_35 = arith.constant dense<0.000000e+00> : vector<8xf32>
    %83 = vector.multi_reduction <add>, %82, %cst_35 [1] : vector<8x8xf32> to vector<8xf32>
    %84 = vector.shape_cast %83 : vector<8xf32> to vector<8x1xf32>
    %85 = tpu.reciprocal %84 {approx = true} : vector<8x1xf32> -> vector<8x1xf32>
    %86 = vector.broadcast %85 : vector<8x1xf32> to vector<8x8xf32>
    %87 = arith.mulf %82, %86 : vector<8x8xf32>
    %cst_36 = arith.constant dense<0.000000e+00> : vector<8x8xf32>
    %88 = tpu.matmul %87, %74, %cst_36 {dimension_numbers = #tpu.dot_dimension_numbers<[1], [0], [0], [1], [0, 0, 1, 1], [], []>} : vector<8x8xf32>, vector<8x8xf32>, vector<8x8xf32> -> vector<8x8xf32>
    %89 = tpu.concatenate %37, %54, %71, %88 in 1 : vector<8x8xf32>, vector<8x8xf32>, vector<8x8xf32>, vector<8x8xf32> -> vector<8x32xf32>
    %c0_37 = arith.constant 0 : index
    %c0_38 = arith.constant 0 : index
    %c0_39 = arith.constant 0 : index
    %90 = vector.load %arg10[%c0_37, %c0_38, %c0_39] : memref<1x8x32xf32, #tpu.memory_space<vmem>>, vector<1x8x32xf32>
    %91 = vector.shape_cast %90 : vector<1x8x32xf32> to vector<8x32xf32>
    %92 = vector.shape_cast %89 : vector<8x32xf32> to vector<1x8x32xf32>
    tpu.vector_store %arg10[%c0_37, %c0_38, %c0_39], %92 {strides = array<i32>} : memref<1x8x32xf32, #tpu.memory_space<vmem>>, vector<1x8x32xf32>,
    return
  }
  func.func @transform_0(%arg0: i32, %arg1: i32) -> (i32, i32, i32) {
    %c0_i32 = arith.constant 0 : i32
    %c0_i32_0 = arith.constant 0 : i32
    %c0_i32_1 = arith.constant 0 : i32
    return %arg0, %c0_i32, %c0_i32_0 : i32, i32, i32
  }
  func.func @transform_1(%arg0: i32, %arg1: i32) -> (i32, i32) {
    %c0_i32 = arith.constant 0 : i32
    %c0_i32_0 = arith.constant 0 : i32
    return %c0_i32, %arg1 : i32, i32
  }
  func.func @transform_2(%arg0: i32, %arg1: i32) -> (i32, i32) {
    %c0_i32 = arith.constant 0 : i32
    %c0_i32_0 = arith.constant 0 : i32
    return %c0_i32, %arg1 : i32, i32
  }
  func.func @transform_3(%arg0: i32, %arg1: i32) -> (i32, i32) {
    %c0_i32 = arith.constant 0 : i32
    %c0_i32_0 = arith.constant 0 : i32
    return %c0_i32, %arg1 : i32, i32
  }
  func.func @transform_4(%arg0: i32, %arg1: i32) -> (i32, i32) {
    %c0_i32 = arith.constant 0 : i32
    %c0_i32_0 = arith.constant 0 : i32
    return %c0_i32, %arg1 : i32, i32
  }
  func.func @transform_5(%arg0: i32, %arg1: i32) -> (i32, i32) {
    %c0_i32 = arith.constant 0 : i32
    %c0_i32_0 = arith.constant 0 : i32
    return %c0_i32, %arg1 : i32, i32
  }
  func.func @transform_6(%arg0: i32, %arg1: i32) -> (i32, i32) {
    %c0_i32 = arith.constant 0 : i32
    %c0_i32_0 = arith.constant 0 : i32
    return %c0_i32, %arg1 : i32, i32
  }
  func.func @transform_7(%arg0: i32, %arg1: i32) -> (i32, i32, i32, i32) {
    %c0_i32 = arith.constant 0 : i32
    %c0_i32_0 = arith.constant 0 : i32
    %c0_i32_1 = arith.constant 0 : i32
    %c0_i32_2 = arith.constant 0 : i32
    return %arg0, %c0_i32, %c0_i32_0, %c0_i32_1 : i32, i32, i32, i32
  }
  func.func @transform_8(%arg0: i32, %arg1: i32) -> (i32, i32, i32) {
    %c0_i32 = arith.constant 0 : i32
    %c0_i32_0 = arith.constant 0 : i32
    return %arg0, %c0_i32, %arg1 : i32, i32, i32
  }
}

</mosaic_0001>

<llo_original>
// kernel: tpu_custom_call.1
$region0: #{tpu_custom_call.1}
  #allocation0 [shape = 'u32[]', space=smem, size = 0x4, offset = 0x4, fixed_abs, tag = 'smem constant byte address 0x4 - core index']
  #allocation1 [shape = 'u32[144,128]{1,0:T(1,128)}', space=vmem, size = 0x12000, scoped, tag = 'internal scratch']
  %s0 = inlined_call_operand.hbm [shape: f32[2,8,32], index: 0, kind: input, shape index: {}]
  %s1 = inlined_call_operand.hbm [shape: f32[32,32], index: 1, kind: input, shape index: {}]
  %s2 = inlined_call_operand.hbm [shape: f32[32,32], index: 2, kind: input, shape index: {}]
  %s3 = inlined_call_operand.hbm [shape: f32[32,32], index: 3, kind: input, shape index: {}]
  %s4 = inlined_call_operand.vmem [shape: f32[1,32], index: 4, kind: input, shape index: {}]
  %s5 = inlined_call_operand.vmem [shape: f32[1,32], index: 5, kind: input, shape index: {}]
  %s6 = inlined_call_operand.vmem [shape: f32[1,32], index: 6, kind: input, shape index: {}]
  %s7 = inlined_call_operand.vmem [shape: f32[2,1,1,8], index: 7, kind: input, shape index: {}]
  %s8 = inlined_call_operand.hbm [shape: f32[2,8,32], index: 8, kind: output, shape index: {}]
  %s9 = sld [smem:[#allocation0]]
  $region81: #{tpu_custom_call.1} parent=0
    _
  %s11 = ssub.s32 1, %s9
  %s12 = scalar_select 0, %s11, %s9
  $region1: #{tpu_custom_call.1} parent=0
    #allocation2 [shape = 'u8[8192]{0}', space=vmem, size = 0x2000, scoped, tag = 'input window, operand 0']
    #allocation3 [shape = 's32[2]{0}', space=sflag, size = 0x8, scoped, tag = 'scoped memory for tpu_custom_call.1']
    #allocation4 [shape = 's32[2]{0}', space=sflag, size = 0x8, scoped, tag = 'scoped memory for tpu_custom_call.1']
    #allocation5 [shape = 'u8[16384]{0}', space=vmem, size = 0x4000, scoped, tag = 'input window, operand 1, single buffered']
    #allocation6 [shape = 's32[1]{0}', space=sflag, size = 0x4, scoped, tag = 'scoped memory for tpu_custom_call.1']
    #allocation7 [shape = 'u8[16384]{0}', space=vmem, size = 0x4000, scoped, tag = 'input window, operand 2, single buffered']
    #allocation8 [shape = 'u8[16384]{0}', space=vmem, size = 0x4000, scoped, tag = 'input window, operand 3, single buffered']
    #allocation9 [shape = 's32[1]{0}', space=sflag, size = 0x4, scoped, tag = 'scoped memory for tpu_custom_call.1']
    #allocation10 [shape = 'u8[8192]{0}', space=vmem, size = 0x2000, scoped, tag = 'output window, operand 0']
    %13 = vsyncpa [#allocation3], 0
    %s14 = scalar_lea.sflag [#allocation3], 1
    %15 = vsyncpa %s14, 0
    %16 = vsyncpa [#allocation6], 0
    %17 = vsyncpa [#allocation9], 0
    %18 = vsyncpa [#allocation4], 0
    %s19 = scalar_lea.sflag [#allocation4], 1
    %20 = vsyncpa %s19, 0
    loop: start=0, step=1, limit=4
    $region2: #{tpu_custom_call.1} parent=1 // loop_pre_header
      _
    $region3: #{tpu_custom_call.1} parent=1 // loop_header
      %s22 = sphi 0, %s26
      %p23 = scmp.ge.s32.totalorder %s22, 4
      %s29 = sphi 0, %s41
      %s30 = sphi 0, %s37
      %s31 = sphi 0, %s29
      %s32 = sphi 0, %s30
      %s33 = sphi 0, %s31
      %s34 = sphi 0, %s32
      %s44 = sphi 0, %s46
      %s47 = sphi 0, %s44
      %s48 = sphi 0, %s47
      %s64 = sphi 0, %s48
      %s70 = sphi 0, %s72
      %s73 = sphi 0, %s70
      %s74 = sphi 0, %s73
      %s90 = sphi 0, %s74
      %s96 = sphi 0, %s98
      %s99 = sphi 0, %s96
      %s100 = sphi 0, %s99
      %s116 = sphi 0, %s100
      %s122 = sphi 0, %s124
      %s125 = sphi 0, %s122
      %s126 = sphi 0, %s125
      %s142 = sphi 0, %s126
      %s148 = sphi 0, %s150
      %s151 = sphi 0, %s148
      %s152 = sphi 0, %s151
      %s168 = sphi 0, %s152
      %s174 = sphi 0, %s176
      %s177 = sphi 0, %s174
      %s178 = sphi 0, %s177
      %s194 = sphi 0, %s178
      %s200 = sphi 0, %s202
      %s203 = sphi 0, %s200
      %s204 = sphi 0, %s203
      %s220 = sphi 0, %s204
      %s226 = sphi 0, %s228
      %s229 = sphi 0, %s226
      %s230 = sphi 0, %s229
      %s246 = sphi 0, %s230
      %s254 = sphi 0, %s256
      %s257 = sphi 0, %s254
      %s258 = sphi 0, %s257
      %s274 = sphi 0, %s258
    $region4: #{tpu_custom_call.1} parent=1 // loop_header_branch
      %25 = sbr.rel (%p23) target = $region8
    $region5: #{tpu_custom_call.1} parent=1 // loop_body
      %s27 = ssub.s32 %s22, 1
      %s28 = ssub.s32 %s22, 2
      %s35 = sadd.s32 1, %s30
      %p36 = scmp.ge.s32.totalorder %s35, 1
      %s37 = scalar_select %p36, 0, %s35
      %s38 = sadd.s32 1, %s29
      %s39 = scalar_select %p36, %s38, %s29
      %p40 = scmp.ge.s32.totalorder %s39, 2
      %s41 = scalar_select %p40, 0, %s39
      %s42 = ssub.s32 %s29, %s41
      %p43 = scmp.eq.s32.totalorder %s42, 0
      %s45 = sadd.s32 %s44, 1
      %s46 = scalar_select %p43, %s44, %s45
      %p49 = pneg %p43
      %p50 = scmp.eq.s32.totalorder %s22, 1
      %p51 = por %p49, %p50
      %p52 = scmp.ne.s32.totalorder %s44, %s47
      %p53 = scmp.eq.s32.totalorder %s22, 0
      %p54 = por %p52, %p53
      %p55 = scmp.ne.s32.totalorder %s44, %s47
      %p56 = scmp.eq.s32.totalorder %s27, 1
      %p57 = por %p55, %p56
      %p58 = scmp.ne.s32.totalorder %s47, %s48
      %p59 = scmp.eq.s32.totalorder %s27, 0
      %p60 = por %p58, %p59
      %p61 = scmp.ne.s32.totalorder %s47, %s48
      %p62 = scmp.eq.s32.totalorder %s28, 1
      %p63 = por %p61, %p62
      %p65 = scmp.ne.s32.totalorder %s48, %s64
      %p66 = scmp.eq.s32.totalorder %s28, 0
      %p67 = por %p65, %p66
      %s68 = ssub.s32 %s30, %s37
      %p69 = scmp.eq.s32.totalorder %s68, 0
      %s71 = sadd.s32 %s70, 1
      %s72 = scalar_select %p69, %s70, %s71
      %p75 = pneg %p69
      %p76 = scmp.eq.s32.totalorder %s22, 1
      %p77 = por %p75, %p76
      %p78 = scmp.ne.s32.totalorder %s70, %s73
      %p79 = scmp.eq.s32.totalorder %s22, 0
      %p80 = por %p78, %p79
      %p81 = scmp.ne.s32.totalorder %s70, %s73
      %p82 = scmp.eq.s32.totalorder %s27, 1
      %p83 = por %p81, %p82
      %p84 = scmp.ne.s32.totalorder %s73, %s74
      %p85 = scmp.eq.s32.totalorder %s27, 0
      %p86 = por %p84, %p85
      %p87 = scmp.ne.s32.totalorder %s73, %s74
      %p88 = scmp.eq.s32.totalorder %s28, 1
      %p89 = por %p87, %p88
      %p91 = scmp.ne.s32.totalorder %s74, %s90
      %p92 = scmp.eq.s32.totalorder %s28, 0
      %p93 = por %p91, %p92
      %s94 = ssub.s32 %s30, %s37
      %p95 = scmp.eq.s32.totalorder %s94, 0
      %s97 = sadd.s32 %s96, 1
      %s98 = scalar_select %p95, %s96, %s97
      %p101 = pneg %p95
      %p102 = scmp.eq.s32.totalorder %s22, 1
      %p103 = por %p101, %p102
      %p104 = scmp.ne.s32.totalorder %s96, %s99
      %p105 = scmp.eq.s32.totalorder %s22, 0
      %p106 = por %p104, %p105
      %p107 = scmp.ne.s32.totalorder %s96, %s99
      %p108 = scmp.eq.s32.totalorder %s27, 1
      %p109 = por %p107, %p108
      %p110 = scmp.ne.s32.totalorder %s99, %s100
      %p111 = scmp.eq.s32.totalorder %s27, 0
      %p112 = por %p110, %p111
      %p113 = scmp.ne.s32.totalorder %s99, %s100
      %p114 = scmp.eq.s32.totalorder %s28, 1
      %p115 = por %p113, %p114
      %p117 = scmp.ne.s32.totalorder %s100, %s116
      %p118 = scmp.eq.s32.totalorder %s28, 0
      %p119 = por %p117, %p118
      %s120 = ssub.s32 %s30, %s37
      %p121 = scmp.eq.s32.totalorder %s120, 0
      %s123 = sadd.s32 %s122, 1
      %s124 = scalar_select %p121, %s122, %s123
      %p127 = pneg %p121
      %p128 = scmp.eq.s32.totalorder %s22, 1
      %p129 = por %p127, %p128
      %p130 = scmp.ne.s32.totalorder %s122, %s125
      %p131 = scmp.eq.s32.totalorder %s22, 0
      %p132 = por %p130, %p131
      %p133 = scmp.ne.s32.totalorder %s122, %s125
      %p134 = scmp.eq.s32.totalorder %s27, 1
      %p135 = por %p133, %p134
      %p136 = scmp.ne.s32.totalorder %s125, %s126
      %p137 = scmp.eq.s32.totalorder %s27, 0
      %p138 = por %p136, %p137
      %p139 = scmp.ne.s32.totalorder %s125, %s126
      %p140 = scmp.eq.s32.totalorder %s28, 1
      %p141 = por %p139, %p140
      %p143 = scmp.ne.s32.totalorder %s126, %s142
      %p144 = scmp.eq.s32.totalorder %s28, 0
      %p145 = por %p143, %p144
      %s146 = ssub.s32 %s30, %s37
      %p147 = scmp.eq.s32.totalorder %s146, 0
      %s149 = sadd.s32 %s148, 1
      %s150 = scalar_select %p147, %s148, %s149
      %p153 = pneg %p147
      %p154 = scmp.eq.s32.totalorder %s22, 1
      %p155 = por %p153, %p154
      %p156 = scmp.ne.s32.totalorder %s148, %s151
      %p157 = scmp.eq.s32.totalorder %s22, 0
      %p158 = por %p156, %p157
      %p159 = scmp.ne.s32.totalorder %s148, %s151
      %p160 = scmp.eq.s32.totalorder %s27, 1
      %p161 = por %p159, %p160
      %p162 = scmp.ne.s32.totalorder %s151, %s152
      %p163 = scmp.eq.s32.totalorder %s27, 0
      %p164 = por %p162, %p163
      %p165 = scmp.ne.s32.totalorder %s151, %s152
      %p166 = scmp.eq.s32.totalorder %s28, 1
      %p167 = por %p165, %p166
      %p169 = scmp.ne.s32.totalorder %s152, %s168
      %p170 = scmp.eq.s32.totalorder %s28, 0
      %p171 = por %p169, %p170
      %s172 = ssub.s32 %s30, %s37
      %p173 = scmp.eq.s32.totalorder %s172, 0
      %s175 = sadd.s32 %s174, 1
      %s176 = scalar_select %p173, %s174, %s175
      %p179 = pneg %p173
      %p180 = scmp.eq.s32.totalorder %s22, 1
      %p181 = por %p179, %p180
      %p182 = scmp.ne.s32.totalorder %s174, %s177
      %p183 = scmp.eq.s32.totalorder %s22, 0
      %p184 = por %p182, %p183
      %p185 = scmp.ne.s32.totalorder %s174, %s177
      %p186 = scmp.eq.s32.totalorder %s27, 1
      %p187 = por %p185, %p186
      %p188 = scmp.ne.s32.totalorder %s177, %s178
      %p189 = scmp.eq.s32.totalorder %s27, 0
      %p190 = por %p188, %p189
      %p191 = scmp.ne.s32.totalorder %s177, %s178
      %p192 = scmp.eq.s32.totalorder %s28, 1
      %p193 = por %p191, %p192
      %p195 = scmp.ne.s32.totalorder %s178, %s194
      %p196 = scmp.eq.s32.totalorder %s28, 0
      %p197 = por %p195, %p196
      %s198 = ssub.s32 %s30, %s37
      %p199 = scmp.eq.s32.totalorder %s198, 0
      %s201 = sadd.s32 %s200, 1
      %s202 = scalar_select %p199, %s200, %s201
      %p205 = pneg %p199
      %p206 = scmp.eq.s32.totalorder %s22, 1
      %p207 = por %p205, %p206
      %p208 = scmp.ne.s32.totalorder %s200, %s203
      %p209 = scmp.eq.s32.totalorder %s22, 0
      %p210 = por %p208, %p209
      %p211 = scmp.ne.s32.totalorder %s200, %s203
      %p212 = scmp.eq.s32.totalorder %s27, 1
      %p213 = por %p211, %p212
      %p214 = scmp.ne.s32.totalorder %s203, %s204
      %p215 = scmp.eq.s32.totalorder %s27, 0
      %p216 = por %p214, %p215
      %p217 = scmp.ne.s32.totalorder %s203, %s204
      %p218 = scmp.eq.s32.totalorder %s28, 1
      %p219 = por %p217, %p218
      %p221 = scmp.ne.s32.totalorder %s204, %s220
      %p222 = scmp.eq.s32.totalorder %s28, 0
      %p223 = por %p221, %p222
      %s224 = ssub.s32 %s29, %s41
      %p225 = scmp.eq.s32.totalorder %s224, 0
      %s227 = sadd.s32 %s226, 1
      %s228 = scalar_select %p225, %s226, %s227
      %p231 = pneg %p225
      %p232 = scmp.eq.s32.totalorder %s22, 1
      %p233 = por %p231, %p232
      %p234 = scmp.ne.s32.totalorder %s226, %s229
      %p235 = scmp.eq.s32.totalorder %s22, 0
      %p236 = por %p234, %p235
      %p237 = scmp.ne.s32.totalorder %s226, %s229
      %p238 = scmp.eq.s32.totalorder %s27, 1
      %p239 = por %p237, %p238
      %p240 = scmp.ne.s32.totalorder %s229, %s230
      %p241 = scmp.eq.s32.totalorder %s27, 0
      %p242 = por %p240, %p241
      %p243 = scmp.ne.s32.totalorder %s229, %s230
      %p244 = scmp.eq.s32.totalorder %s28, 1
      %p245 = por %p243, %p244
      %p247 = scmp.ne.s32.totalorder %s230, %s246
      %p248 = scmp.eq.s32.totalorder %s28, 0
      %p249 = por %p247, %p248
      %s250 = ssub.s32 %s29, %s41
      %s251 = ssub.s32 %s30, %s37
      %s252 = sor.u32 %s250, %s251
      %p253 = scmp.eq.s32.totalorder %s252, 0
      %s255 = sadd.s32 %s254, 1
      %s256 = scalar_select %p253, %s254, %s255
      %p259 = pneg %p253
      %p260 = scmp.eq.s32.totalorder %s22, 1
      %p261 = por %p259, %p260
      %p262 = scmp.ne.s32.totalorder %s254, %s257
      %p263 = scmp.eq.s32.totalorder %s22, 0
      %p264 = por %p262, %p263
      %p265 = scmp.ne.s32.totalorder %s254, %s257
      %p266 = scmp.eq.s32.totalorder %s27, 1
      %p267 = por %p265, %p266
      %p268 = scmp.ne.s32.totalorder %s257, %s258
      %p269 = scmp.eq.s32.totalorder %s27, 0
      %p270 = por %p268, %p269
      %p271 = scmp.ne.s32.totalorder %s257, %s258
      %p272 = scmp.eq.s32.totalorder %s28, 1
      %p273 = por %p271, %p272
      %p275 = scmp.ne.s32.totalorder %s258, %s274
      %p276 = scmp.eq.s32.totalorder %s28, 0
      %p277 = por %p275, %p276
      %p278 = scmp.le.s32.totalorder 1, %s22
      %p279 = scmp.lt.s32.totalorder %s22, 3
      %p280 = pnand %p278, %p279
      %p281 = pneg %p280
      // Predicated region
      $region9: #{tpu_custom_call.1} parent=5 // pred_check
        _
      $region10: #{tpu_custom_call.1} parent=5 // pred_check_branch
        %283 = sbr.rel (%p280) target = $region12
      $region11: #{tpu_custom_call.1} parent=5 // pred_region
        %s284 = ssub.s32 %s22, 1
        // Predicated region
        $region13: #{tpu_custom_call.1} parent=11 // pred_check
          %p285 = pneg %p86
        $region14: #{tpu_custom_call.1} parent=11 // pred_check_branch
          %287 = sbr.rel (%p285) target = $region16
        $region15: #{tpu_custom_call.1} parent=11 // pred_region
          %s289 = ssub.s32 512, 512
          %290 = vsyncadd [#allocation6], %s289
          %s291 = smul.addr %s32, 128
          %s292 = scalar_lea.hbm %s1, %s291
          %s293 = sshll.u32 [#allocation5], 4
          %s294 = int_to_ptr.vmem [resolvable:$true] %s293
          %299 = dma.hbm_to_vmem [thread:$0]  %s292, 512, %s294, [#allocation6], 128, 128, 8
        $region16: #{tpu_custom_call.1} parent=11 // pred_fallthru
          _
        // Predicated region
        $region17: #{tpu_custom_call.1} parent=11 // pred_check
          %p300 = pneg %p112
        $region18: #{tpu_custom_call.1} parent=11 // pred_check_branch
          %302 = sbr.rel (%p300) target = $region20
        $region19: #{tpu_custom_call.1} parent=11 // pred_region
          %s304 = ssub.s32 512, 512
          %305 = vsyncadd [#allocation6], %s304
          %s306 = smul.addr %s32, 128
          %s307 = scalar_lea.hbm %s2, %s306
          %s308 = sshll.u32 [#allocation7], 4
          %s309 = int_to_ptr.vmem [resolvable:$true] %s308
          %314 = dma.hbm_to_vmem [thread:$0]  %s307, 512, %s309, [#allocation6], 128, 128, 8
        $region20: #{tpu_custom_call.1} parent=11 // pred_fallthru
          _
        // Predicated region
        $region21: #{tpu_custom_call.1} parent=11 // pred_check
          %p315 = pneg %p138
        $region22: #{tpu_custom_call.1} parent=11 // pred_check_branch
          %317 = sbr.rel (%p315) target = $region24
        $region23: #{tpu_custom_call.1} parent=11 // pred_region
          %s319 = ssub.s32 512, 512
          %320 = vsyncadd [#allocation9], %s319
          %s321 = smul.addr %s32, 128
          %s322 = scalar_lea.hbm %s3, %s321
          %s323 = sshll.u32 [#allocation8], 4
          %s324 = int_to_ptr.vmem [resolvable:$true] %s323
          %329 = dma.hbm_to_vmem [thread:$0]  %s322, 512, %s324, [#allocation9], 128, 128, 8
        $region24: #{tpu_custom_call.1} parent=11 // pred_fallthru
          _
        // Predicated region
        $region25: #{tpu_custom_call.1} parent=11 // pred_check
          %p330 = pneg %p164
        $region26: #{tpu_custom_call.1} parent=11 // pred_check_branch
          %332 = sbr.rel (%p330) target = $region28
        $region27: #{tpu_custom_call.1} parent=11 // pred_region
          %p333 = scmp.lt.s32.totalorder %s32, 0
          %s334 = scalar_select %p333, %s32, 0
          %s335 = scalar_lea.vmem %s4, %s334
        $region28: #{tpu_custom_call.1} parent=11 // pred_fallthru
          _
        // Predicated region
        $region29: #{tpu_custom_call.1} parent=11 // pred_check
          %p336 = pneg %p190
        $region30: #{tpu_custom_call.1} parent=11 // pred_check_branch
          %338 = sbr.rel (%p336) target = $region32
        $region31: #{tpu_custom_call.1} parent=11 // pred_region
          %p339 = scmp.lt.s32.totalorder %s32, 0
          %s340 = scalar_select %p339, %s32, 0
          %s341 = scalar_lea.vmem %s5, %s340
        $region32: #{tpu_custom_call.1} parent=11 // pred_fallthru
          _
        // Predicated region
        $region33: #{tpu_custom_call.1} parent=11 // pred_check
          %p342 = pneg %p216
        $region34: #{tpu_custom_call.1} parent=11 // pred_check_branch
          %344 = sbr.rel (%p342) target = $region36
        $region35: #{tpu_custom_call.1} parent=11 // pred_region
          %p345 = scmp.lt.s32.totalorder %s32, 0
          %s346 = scalar_select %p345, %s32, 0
          %s347 = scalar_lea.vmem %s6, %s346
        $region36: #{tpu_custom_call.1} parent=11 // pred_fallthru
          _
      $region12: #{tpu_custom_call.1} parent=5 // pred_fallthru
        _
      %p348 = scmp.lt.s32.totalorder %s22, 2
      // Predicated region
      $region37: #{tpu_custom_call.1} parent=5 // pred_check
        %p349 = pneg %p348
      $region38: #{tpu_custom_call.1} parent=5 // pred_check_branch
        %351 = sbr.rel (%p349) target = $region40
      $region39: #{tpu_custom_call.1} parent=5 // pred_region
        // Predicated region
        $region41: #{tpu_custom_call.1} parent=39 // pred_check
          %p352 = pneg %p54
        $region42: #{tpu_custom_call.1} parent=39 // pred_check_branch
          %354 = sbr.rel (%p352) target = $region44
        $region43: #{tpu_custom_call.1} parent=39 // pred_region
          %s355 = sand.u32 %s44, 1
          %s356 = scalar_lea.sflag [#allocation3], %s355
          %s357 = sand.u32 %s44, 1
          %s358 = smul.addr %s357, 8
          %s359 = scalar_lea.vmem [#allocation2], %s358
          %s361 = ssub.s32 128, 128
          %362 = vsyncadd %s356, %s361
          %s363 = smul.addr %s29, 128
          %s364 = scalar_lea.hbm %s0, %s363
          %s366 = sshll.u32 %s359, 4
          %s367 = int_to_ptr.vmem [resolvable:$true] %s366
          %369 = dma.hbm_to_vmem [thread:$0]  %s364, 128, %s367, %s356
        $region44: #{tpu_custom_call.1} parent=39 // pred_fallthru
          _
        // Predicated region
        $region45: #{tpu_custom_call.1} parent=39 // pred_check
          %p370 = pneg %p236
        $region46: #{tpu_custom_call.1} parent=39 // pred_check_branch
          %372 = sbr.rel (%p370) target = $region48
        $region47: #{tpu_custom_call.1} parent=39 // pred_region
          %p373 = scmp.lt.s32.totalorder %s29, 1
          %s374 = scalar_select %p373, %s29, 1
          %s375 = scalar_lea.vmem %s7, %s374
        $region48: #{tpu_custom_call.1} parent=39 // pred_fallthru
          _
      $region40: #{tpu_custom_call.1} parent=5 // pred_fallthru
        _
      %p376 = scmp.le.s32.totalorder 1, %s22
      %p377 = scmp.lt.s32.totalorder %s22, 3
      %p378 = pnand %p376, %p377
      %p379 = pneg %p378
      // Predicated region
      $region49: #{tpu_custom_call.1} parent=5 // pred_check
        _
      $region50: #{tpu_custom_call.1} parent=5 // pred_check_branch
        %381 = sbr.rel (%p378) target = $region52
      $region51: #{tpu_custom_call.1} parent=5 // pred_region
        %s382 = ssub.s32 %s22, 1
        %s383 = sand.u32 %s47, 1
        %s384 = scalar_lea.sflag [#allocation3], %s383
        %s385 = sand.u32 %s47, 1
        %s386 = smul.addr %s385, 8
        %s387 = scalar_lea.vmem [#allocation2], %s386
        // Predicated region
        $region53: #{tpu_custom_call.1} parent=51 // pred_check
          %p388 = pneg %p60
        $region54: #{tpu_custom_call.1} parent=51 // pred_check_branch
          %390 = sbr.rel (%p388) target = $region56
        $region55: #{tpu_custom_call.1} parent=51 // pred_region
          %391 = dma.done %s384, 128
        $region56: #{tpu_custom_call.1} parent=51 // pred_fallthru
          _
        // Predicated region
        $region57: #{tpu_custom_call.1} parent=51 // pred_check
          %p392 = pneg %p86
        $region58: #{tpu_custom_call.1} parent=51 // pred_check_branch
          %394 = sbr.rel (%p392) target = $region60
        $region59: #{tpu_custom_call.1} parent=51 // pred_region
          %395 = dma.done [#allocation6], 512
        $region60: #{tpu_custom_call.1} parent=51 // pred_fallthru
          _
        // Predicated region
        $region61: #{tpu_custom_call.1} parent=51 // pred_check
          %p396 = pneg %p112
        $region62: #{tpu_custom_call.1} parent=51 // pred_check_branch
          %398 = sbr.rel (%p396) target = $region64
        $region63: #{tpu_custom_call.1} parent=51 // pred_region
          %399 = dma.done [#allocation6], 512
        $region64: #{tpu_custom_call.1} parent=51 // pred_fallthru
          _
        // Predicated region
        $region65: #{tpu_custom_call.1} parent=51 // pred_check
          %p400 = pneg %p138
        $region66: #{tpu_custom_call.1} parent=51 // pred_check_branch
          %402 = sbr.rel (%p400) target = $region68
        $region67: #{tpu_custom_call.1} parent=51 // pred_region
          %403 = dma.done [#allocation9], 512
        $region68: #{tpu_custom_call.1} parent=51 // pred_fallthru
          _
        %s404 = sand.u32 %s47, 1
        %s405 = scalar_lea.sflag [#allocation3], %s404
        %s406 = sand.u32 %s47, 1
        %s407 = smul.addr %s406, 8
        %s408 = scalar_lea.vmem [#allocation2], %s407
        %p409 = pneg %p60
        %p410 = pneg %p57
        %p411 = pneg %p86
        %p412 = pneg %p83
        %p413 = pneg %p112
        %p414 = pneg %p109
        %p415 = pneg %p138
        %p416 = pneg %p135
        %p417 = scmp.lt.s32.totalorder %s32, 0
        %s418 = scalar_select %p417, %s32, 0
        %s419 = scalar_lea.vmem %s4, %s418
        %p420 = pneg %p164
        %p421 = pneg %p161
        %p422 = scmp.lt.s32.totalorder %s32, 0
        %s423 = scalar_select %p422, %s32, 0
        %s424 = scalar_lea.vmem %s5, %s423
        %p425 = pneg %p190
        %p426 = pneg %p187
        %p427 = scmp.lt.s32.totalorder %s32, 0
        %s428 = scalar_select %p427, %s32, 0
        %s429 = scalar_lea.vmem %s6, %s428
        %p430 = pneg %p216
        %p431 = pneg %p213
        %p432 = scmp.lt.s32.totalorder %s31, 1
        %s433 = scalar_select %p432, %s31, 1
        %s434 = scalar_lea.vmem %s7, %s433
        %p435 = pneg %p242
        %p436 = pneg %p239
        %p437 = pneg %p270
        %p438 = pneg %p267
        %s439 = sand.u32 %s257, 1
        %s440 = scalar_lea.sflag [#allocation4], %s439
        %s441 = sand.u32 %s257, 1
        %s442 = smul.addr %s441, 8
        %s443 = scalar_lea.vmem [#allocation10], %s442
        %p444 = scmp.lt.s32.totalorder %s32, 0
        %s445 = scalar_select %p444, %s32, 0
        %s446 = scalar_lea.vmem %s4, %s445
        %p447 = scmp.lt.s32.totalorder %s32, 0
        %s448 = scalar_select %p447, %s32, 0
        %s449 = scalar_lea.vmem %s5, %s448
        %p450 = scmp.lt.s32.totalorder %s32, 0
        %s451 = scalar_select %p450, %s32, 0
        %s452 = scalar_lea.vmem %s6, %s451
        %p453 = scmp.lt.s32.totalorder %s31, 1
        %s454 = scalar_select %p453, %s31, 1
        %s455 = scalar_lea.vmem %s7, %s454
        %v456 = vld [vmem:[%s387] sm:$0xff]
        %v457 = vld [vmem:[#allocation5] sm:$0xff]
        %v458 = vld [vmem:[#allocation5 + $0x8] sm:$0xff]
        %v459 = vld [vmem:[#allocation5 + $0x10] sm:$0xff]
        %v460 = vld [vmem:[#allocation5 + $0x18] sm:$0xff]
        %v461 = vld [vmem:[%s446] sm:$0x1]
        %v463 = vlaneseq
        %v464 = vshrl.u32 %v463, 7
        %v465 = vsub.s32 0, %v464
        %v466 = vrot.slane %v461, %v465
        %vm468 = vcmask 261120
        %v470 = vsel %vm468, %v456, 0
        %472 = vmatprep.subr.mxu0 0.0
        %473 = vmatpush1.msra.mxu0 0.0
        %474 = vmatprep.subr.mxu0 0.0
        %475 = vmatpush1.msra.mxu0 0.0
        %476 = vmatprep.subr.mxu0 0.0
        %477 = vmatpush1.msra.mxu0 0.0
        %478 = vmatprep.subr.mxu0 0.0
        %479 = vmatpush1.msra.mxu0 0.0
        %480 = vmatprep.subr.mxu0 0.0
        %481 = vmatpush1.msra.mxu0 0.0
        %482 = vmatprep.subr.mxu0 0.0
        %483 = vmatpush1.msra.mxu0 0.0
        %484 = vmatprep.subr.mxu0 0.0
        %485 = vmatpush1.msra.mxu0 0.0
        %486 = vmatprep.subr.mxu0 0.0
        %487 = vmatpush1.msra.mxu0 0.0
        %488 = vmatprep.subr.mxu0 0.0
        %489 = vmatpush1.msra.mxu0 0.0
        %490 = vmatprep.subr.mxu0 0.0
        %491 = vmatpush1.msra.mxu0 0.0
        %492 = vmatprep.subr.mxu0 0.0
        %493 = vmatpush1.msra.mxu0 0.0
        %494 = vmatprep.subr.mxu0 0.0
        %495 = vmatpush1.msra.mxu0 0.0
        %496 = vmatprep.subr.mxu0 0.0
        %497 = vmatpush1.msra.mxu0 %v460
        %498 = vmatprep.subr.mxu0 0.0
        %499 = vmatpush1.msra.mxu0 %v459
        %500 = vmatprep.subr.mxu0 0.0
        %501 = vmatpush1.msra.mxu0 %v458
        %502 = vmatprep.subr.mxu0 0.0
        %503 = vmatpush1.msra.mxu0 %v457
        %504 = vmatprep.subr.mxu0 0.0
        %505 = vmatpush2.msra.mxu0 0.0
        %506 = vmatprep.subr.mxu0 0.0
        %507 = vmatpush2.msra.mxu0 0.0
        %508 = vmatprep.subr.mxu0 0.0
        %509 = vmatpush2.msra.mxu0 0.0
        %510 = vmatprep.subr.mxu0 0.0
        %511 = vmatpush2.msra.mxu0 0.0
        %512 = vmatprep.subr.mxu0 0.0
        %513 = vmatpush2.msra.mxu0 0.0
        %514 = vmatprep.subr.mxu0 0.0
        %515 = vmatpush2.msra.mxu0 0.0
        %516 = vmatprep.subr.mxu0 0.0
        %517 = vmatpush2.msra.mxu0 0.0
        %518 = vmatprep.subr.mxu0 0.0
        %519 = vmatpush2.msra.mxu0 0.0
        %520 = vmatprep.subr.mxu0 0.0
        %521 = vmatpush2.msra.mxu0 0.0
        %522 = vmatprep.subr.mxu0 0.0
        %523 = vmatpush2.msra.mxu0 0.0
        %524 = vmatprep.subr.mxu0 0.0
        %525 = vmatpush2.msra.mxu0 0.0
        %526 = vmatprep.subr.mxu0 0.0
        %527 = vmatpush2.msra.mxu0 0.0
        %528 = vmatprep.subr.mxu0 0.0
        %529 = vmatpush2.msra.mxu0 0.0
        %530 = vmatprep.subr.mxu0 0.0
        %531 = vmatpush2.msra.mxu0 0.0
        %532 = vmatprep.subr.mxu0 0.0
        %533 = vmatpush2.msra.mxu0 0.0
        %534 = vmatprep.subr.mxu0 0.0
        %535 = vmatpush2.msra.mxu0 0.0
        %536 = vmatprep.mubr.f32.mxu0 0.0
        %537 = vmatmul.mubr.f32.gmra.mxu0 %v470
        %v538 = vpop.f32.mrf.mxu0
        %v539 = vadd.f32 %v466, %v538
        %v540 = vpop.f32.mrf.mxu0
        %541 = vdwg.mxu0
        %v542 = vld [vmem:[#allocation7] sm:$0xff]
        %v543 = vld [vmem:[#allocation7 + $0x8] sm:$0xff]
        %v544 = vld [vmem:[#allocation7 + $0x10] sm:$0xff]
        %v545 = vld [vmem:[#allocation7 + $0x18] sm:$0xff]
        %v546 = vld [vmem:[%s449] sm:$0x1]
        %v548 = vlaneseq
        %v549 = vshrl.u32 %v548, 7
        %v550 = vsub.s32 0, %v549
        %v551 = vrot.slane %v546, %v550
        %553 = vmatprep.subr.mxu0 0.0
        %554 = vmatpush1.msra.mxu0 0.0
        %555 = vmatprep.subr.mxu0 0.0
        %556 = vmatpush1.msra.mxu0 0.0
        %557 = vmatprep.subr.mxu0 0.0
        %558 = vmatpush1.msra.mxu0 0.0
        %559 = vmatprep.subr.mxu0 0.0
        %560 = vmatpush1.msra.mxu0 0.0
        %561 = vmatprep.subr.mxu0 0.0
        %562 = vmatpush1.msra.mxu0 0.0
        %563 = vmatprep.subr.mxu0 0.0
        %564 = vmatpush1.msra.mxu0 0.0
        %565 = vmatprep.subr.mxu0 0.0
        %566 = vmatpush1.msra.mxu0 0.0
        %567 = vmatprep.subr.mxu0 0.0
        %568 = vmatpush1.msra.mxu0 0.0
        %569 = vmatprep.subr.mxu0 0.0
        %570 = vmatpush1.msra.mxu0 0.0
        %571 = vmatprep.subr.mxu0 0.0
        %572 = vmatpush1.msra.mxu0 0.0
        %573 = vmatprep.subr.mxu0 0.0
        %574 = vmatpush1.msra.mxu0 0.0
        %575 = vmatprep.subr.mxu0 0.0
        %576 = vmatpush1.msra.mxu0 0.0
        %577 = vmatprep.subr.mxu0 0.0
        %578 = vmatpush1.msra.mxu0 %v545
        %579 = vmatprep.subr.mxu0 0.0
        %580 = vmatpush1.msra.mxu0 %v544
        %581 = vmatprep.subr.mxu0 0.0
        %582 = vmatpush1.msra.mxu0 %v543
        %583 = vmatprep.subr.mxu0 0.0
        %584 = vmatpush1.msra.mxu0 %v542
        %585 = vmatprep.subr.mxu0 0.0
        %586 = vmatpush2.msra.mxu0 0.0
        %587 = vmatprep.subr.mxu0 0.0
        %588 = vmatpush2.msra.mxu0 0.0
        %589 = vmatprep.subr.mxu0 0.0
        %590 = vmatpush2.msra.mxu0 0.0
        %591 = vmatprep.subr.mxu0 0.0
        %592 = vmatpush2.msra.mxu0 0.0
        %593 = vmatprep.subr.mxu0 0.0
        %594 = vmatpush2.msra.mxu0 0.0
        %595 = vmatprep.subr.mxu0 0.0
        %596 = vmatpush2.msra.mxu0 0.0
        %597 = vmatprep.subr.mxu0 0.0
        %598 = vmatpush2.msra.mxu0 0.0
        %599 = vmatprep.subr.mxu0 0.0
        %600 = vmatpush2.msra.mxu0 0.0
        %601 = vmatprep.subr.mxu0 0.0
        %602 = vmatpush2.msra.mxu0 0.0
        %603 = vmatprep.subr.mxu0 0.0
        %604 = vmatpush2.msra.mxu0 0.0
        %605 = vmatprep.subr.mxu0 0.0
        %606 = vmatpush2.msra.mxu0 0.0
        %607 = vmatprep.subr.mxu0 0.0
        %608 = vmatpush2.msra.mxu0 0.0
        %609 = vmatprep.subr.mxu0 0.0
        %610 = vmatpush2.msra.mxu0 0.0
        %611 = vmatprep.subr.mxu0 0.0
        %612 = vmatpush2.msra.mxu0 0.0
        %613 = vmatprep.subr.mxu0 0.0
        %614 = vmatpush2.msra.mxu0 0.0
        %615 = vmatprep.subr.mxu0 0.0
        %616 = vmatpush2.msra.mxu0 0.0
        %617 = vmatprep.mubr.f32.mxu0 0.0
        %618 = vmatmul.mubr.f32.gmra.mxu0 %v470
        %v619 = vpop.f32.mrf.mxu0
        %v620 = vadd.f32 %v551, %v619
        %v621 = vpop.f32.mrf.mxu0
        %622 = vdwg.mxu0
        %v623 = vld [vmem:[#allocation8] sm:$0xff]
        %v624 = vld [vmem:[#allocation8 + $0x8] sm:$0xff]
        %v625 = vld [vmem:[#allocation8 + $0x10] sm:$0xff]
        %v626 = vld [vmem:[#allocation8 + $0x18] sm:$0xff]
        %v627 = vld [vmem:[%s452] sm:$0x1]
        %v629 = vlaneseq
        %v630 = vshrl.u32 %v629, 7
        %v631 = vsub.s32 0, %v630
        %v632 = vrot.slane %v627, %v631
        %634 = vmatprep.subr.mxu0 0.0
        %635 = vmatpush1.msra.mxu0 0.0
        %636 = vmatprep.subr.mxu0 0.0
        %637 = vmatpush1.msra.mxu0 0.0
        %638 = vmatprep.subr.mxu0 0.0
        %639 = vmatpush1.msra.mxu0 0.0
        %640 = vmatprep.subr.mxu0 0.0
        %641 = vmatpush1.msra.mxu0 0.0
        %642 = vmatprep.subr.mxu0 0.0
        %643 = vmatpush1.msra.mxu0 0.0
        %644 = vmatprep.subr.mxu0 0.0
        %645 = vmatpush1.msra.mxu0 0.0
        %646 = vmatprep.subr.mxu0 0.0
        %647 = vmatpush1.msra.mxu0 0.0
        %648 = vmatprep.subr.mxu0 0.0
        %649 = vmatpush1.msra.mxu0 0.0
        %650 = vmatprep.subr.mxu0 0.0
        %651 = vmatpush1.msra.mxu0 0.0
        %652 = vmatprep.subr.mxu0 0.0
        %653 = vmatpush1.msra.mxu0 0.0
        %654 = vmatprep.subr.mxu0 0.0
        %655 = vmatpush1.msra.mxu0 0.0
        %656 = vmatprep.subr.mxu0 0.0
        %657 = vmatpush1.msra.mxu0 0.0
        %658 = vmatprep.subr.mxu0 0.0
        %659 = vmatpush1.msra.mxu0 %v626
        %660 = vmatprep.subr.mxu0 0.0
        %661 = vmatpush1.msra.mxu0 %v625
        %662 = vmatprep.subr.mxu0 0.0
        %663 = vmatpush1.msra.mxu0 %v624
        %664 = vmatprep.subr.mxu0 0.0
        %665 = vmatpush1.msra.mxu0 %v623
        %666 = vmatprep.subr.mxu0 0.0
        %667 = vmatpush2.msra.mxu0 0.0
        %668 = vmatprep.subr.mxu0 0.0
        %669 = vmatpush2.msra.mxu0 0.0
        %670 = vmatprep.subr.mxu0 0.0
        %671 = vmatpush2.msra.mxu0 0.0
        %672 = vmatprep.subr.mxu0 0.0
        %673 = vmatpush2.msra.mxu0 0.0
        %674 = vmatprep.subr.mxu0 0.0
        %675 = vmatpush2.msra.mxu0 0.0
        %676 = vmatprep.subr.mxu0 0.0
        %677 = vmatpush2.msra.mxu0 0.0
        %678 = vmatprep.subr.mxu0 0.0
        %679 = vmatpush2.msra.mxu0 0.0
        %680 = vmatprep.subr.mxu0 0.0
        %681 = vmatpush2.msra.mxu0 0.0
        %682 = vmatprep.subr.mxu0 0.0
        %683 = vmatpush2.msra.mxu0 0.0
        %684 = vmatprep.subr.mxu0 0.0
        %685 = vmatpush2.msra.mxu0 0.0
        %686 = vmatprep.subr.mxu0 0.0
        %687 = vmatpush2.msra.mxu0 0.0
        %688 = vmatprep.subr.mxu0 0.0
        %689 = vmatpush2.msra.mxu0 0.0
        %690 = vmatprep.subr.mxu0 0.0
        %691 = vmatpush2.msra.mxu0 0.0
        %692 = vmatprep.subr.mxu0 0.0
        %693 = vmatpush2.msra.mxu0 0.0
        %694 = vmatprep.subr.mxu0 0.0
        %695 = vmatpush2.msra.mxu0 0.0
        %696 = vmatprep.subr.mxu0 0.0
        %697 = vmatpush2.msra.mxu0 0.0
        %698 = vmatprep.mubr.f32.mxu0 0.0
        %699 = vmatmul.mubr.f32.gmra.mxu0 %v470
        %v700 = vpop.f32.mrf.mxu0
        %v701 = vadd.f32 %v632, %v700
        %v702 = vpop.f32.mrf.mxu0
        %703 = vdwg.mxu0
        %v704 = vmul.f32 %v539, 0.35355338
        %v705 = vld [vmem:[%s455] sm:$0x1]
        %v707 = vlaneseq
        %v708 = vshrl.u32 %v707, 7
        %v709 = vsub.s32 0, %v708
        %v710 = vrot.slane %v705, %v709
        %vm712 = vcmask 64512
        %v714 = vsel %vm712, %v704, 0
        %v717 = vsel %vm712, %v620, 0
        %719 = vmatprep.subr.mxu0 0.0
        %720 = vmatpush1.xpose.msra.mxu0 0.0
        %721 = vmatprep.subr.mxu0 0.0
        %722 = vmatpush1.xpose.msra.mxu0 0.0
        %723 = vmatprep.subr.mxu0 0.0
        %724 = vmatpush1.xpose.msra.mxu0 0.0
        %725 = vmatprep.subr.mxu0 0.0
        %726 = vmatpush1.xpose.msra.mxu0 0.0
        %727 = vmatprep.subr.mxu0 0.0
        %728 = vmatpush1.xpose.msra.mxu0 0.0
        %729 = vmatprep.subr.mxu0 0.0
        %730 = vmatpush1.xpose.msra.mxu0 0.0
        %731 = vmatprep.subr.mxu0 0.0
        %732 = vmatpush1.xpose.msra.mxu0 0.0
        %733 = vmatprep.subr.mxu0 0.0
        %734 = vmatpush1.xpose.msra.mxu0 0.0
        %735 = vmatprep.subr.mxu0 0.0
        %736 = vmatpush1.xpose.msra.mxu0 0.0
        %737 = vmatprep.subr.mxu0 0.0
        %738 = vmatpush1.xpose.msra.mxu0 0.0
        %739 = vmatprep.subr.mxu0 0.0
        %740 = vmatpush1.xpose.msra.mxu0 0.0
        %741 = vmatprep.subr.mxu0 0.0
        %742 = vmatpush1.xpose.msra.mxu0 0.0
        %743 = vmatprep.subr.mxu0 0.0
        %744 = vmatpush1.xpose.msra.mxu0 0.0
        %745 = vmatprep.subr.mxu0 0.0
        %746 = vmatpush1.xpose.msra.mxu0 0.0
        %747 = vmatprep.subr.mxu0 0.0
        %748 = vmatpush1.xpose.msra.mxu0 0.0
        %749 = vmatprep.subr.mxu0 0.0
        %750 = vmatpush1.xpose.msra.mxu0 %v717
        %751 = vmatprep.subr.mxu0 0.0
        %752 = vmatpush2.xpose.msra.mxu0 0.0
        %753 = vmatprep.subr.mxu0 0.0
        %754 = vmatpush2.xpose.msra.mxu0 0.0
        %755 = vmatprep.subr.mxu0 0.0
        %756 = vmatpush2.xpose.msra.mxu0 0.0
        %757 = vmatprep.subr.mxu0 0.0
        %758 = vmatpush2.xpose.msra.mxu0 0.0
        %759 = vmatprep.subr.mxu0 0.0
        %760 = vmatpush2.xpose.msra.mxu0 0.0
        %761 = vmatprep.subr.mxu0 0.0
        %762 = vmatpush2.xpose.msra.mxu0 0.0
        %763 = vmatprep.subr.mxu0 0.0
        %764 = vmatpush2.xpose.msra.mxu0 0.0
        %765 = vmatprep.subr.mxu0 0.0
        %766 = vmatpush2.xpose.msra.mxu0 0.0
        %767 = vmatprep.subr.mxu0 0.0
        %768 = vmatpush2.xpose.msra.mxu0 0.0
        %769 = vmatprep.subr.mxu0 0.0
        %770 = vmatpush2.xpose.msra.mxu0 0.0
        %771 = vmatprep.subr.mxu0 0.0
        %772 = vmatpush2.xpose.msra.mxu0 0.0
        %773 = vmatprep.subr.mxu0 0.0
        %774 = vmatpush2.xpose.msra.mxu0 0.0
        %775 = vmatprep.subr.mxu0 0.0
        %776 = vmatpush2.xpose.msra.mxu0 0.0
        %777 = vmatprep.subr.mxu0 0.0
        %778 = vmatpush2.xpose.msra.mxu0 0.0
        %779 = vmatprep.subr.mxu0 0.0
        %780 = vmatpush2.xpose.msra.mxu0 0.0
        %781 = vmatprep.subr.mxu0 0.0
        %782 = vmatpush2.xpose.msra.mxu0 0.0
        %783 = vmatprep.mubr.f32.mxu0 0.0
        %784 = vmatmul.mubr.f32.gmra.mxu0 %v714
        %v785 = vpop.f32.mrf.mxu0
        %v786 = vadd.f32 %v710, %v785
        %v787 = vpop.f32.mrf.mxu0
        %788 = vdwg.mxu0
        %v789 = vsel %vm712, %v786, -inf
        %790 = vmax.xlane.f32.xlu0 %v789
        %v791 = vpop.xlane.xlu0 %790
        %v792 = vsub.f32 %v786, %v791
        %v793 = vmul.f32 %v792, 1.442695
        %v794 = vpow.pop %v793
        %v795 = vsel %vm712, %v794, 0.0
        %796 = vadd.xlane.f32.xlu0 %v795
        %v797 = vpop.xlane.xlu0 %796
        %v798 = vrcp.pop %v797
        %v799 = vmul.f32 %v794, %v798
        %v801 = vsel %vm712, %v799, 0
        %803 = vmatprep.subr.mxu0 0.0
        %804 = vmatpush1.msra.mxu0 0.0
        %805 = vmatprep.subr.mxu0 0.0
        %806 = vmatpush1.msra.mxu0 0.0
        %807 = vmatprep.subr.mxu0 0.0
        %808 = vmatpush1.msra.mxu0 0.0
        %809 = vmatprep.subr.mxu0 0.0
        %810 = vmatpush1.msra.mxu0 0.0
        %811 = vmatprep.subr.mxu0 0.0
        %812 = vmatpush1.msra.mxu0 0.0
        %813 = vmatprep.subr.mxu0 0.0
        %814 = vmatpush1.msra.mxu0 0.0
        %815 = vmatprep.subr.mxu0 0.0
        %816 = vmatpush1.msra.mxu0 0.0
        %817 = vmatprep.subr.mxu0 0.0
        %818 = vmatpush1.msra.mxu0 0.0
        %819 = vmatprep.subr.mxu0 0.0
        %820 = vmatpush1.msra.mxu0 0.0
        %821 = vmatprep.subr.mxu0 0.0
        %822 = vmatpush1.msra.mxu0 0.0
        %823 = vmatprep.subr.mxu0 0.0
        %824 = vmatpush1.msra.mxu0 0.0
        %825 = vmatprep.subr.mxu0 0.0
        %826 = vmatpush1.msra.mxu0 0.0
        %827 = vmatprep.subr.mxu0 0.0
        %828 = vmatpush1.msra.mxu0 0.0
        %829 = vmatprep.subr.mxu0 0.0
        %830 = vmatpush1.msra.mxu0 0.0
        %831 = vmatprep.subr.mxu0 0.0
        %832 = vmatpush1.msra.mxu0 0.0
        %833 = vmatprep.subr.mxu0 0.0
        %834 = vmatpush1.msra.mxu0 %v701
        %835 = vmatprep.subr.mxu0 0.0
        %836 = vmatpush2.msra.mxu0 0.0
        %837 = vmatprep.subr.mxu0 0.0
        %838 = vmatpush2.msra.mxu0 0.0
        %839 = vmatprep.subr.mxu0 0.0
        %840 = vmatpush2.msra.mxu0 0.0
        %841 = vmatprep.subr.mxu0 0.0
        %842 = vmatpush2.msra.mxu0 0.0
        %843 = vmatprep.subr.mxu0 0.0
        %844 = vmatpush2.msra.mxu0 0.0
        %845 = vmatprep.subr.mxu0 0.0
        %846 = vmatpush2.msra.mxu0 0.0
        %847 = vmatprep.subr.mxu0 0.0
        %848 = vmatpush2.msra.mxu0 0.0
        %849 = vmatprep.subr.mxu0 0.0
        %850 = vmatpush2.msra.mxu0 0.0
        %851 = vmatprep.subr.mxu0 0.0
        %852 = vmatpush2.msra.mxu0 0.0
        %853 = vmatprep.subr.mxu0 0.0
        %854 = vmatpush2.msra.mxu0 0.0
        %855 = vmatprep.subr.mxu0 0.0
        %856 = vmatpush2.msra.mxu0 0.0
        %857 = vmatprep.subr.mxu0 0.0
        %858 = vmatpush2.msra.mxu0 0.0
        %859 = vmatprep.subr.mxu0 0.0
        %860 = vmatpush2.msra.mxu0 0.0
        %861 = vmatprep.subr.mxu0 0.0
        %862 = vmatpush2.msra.mxu0 0.0
        %863 = vmatprep.subr.mxu0 0.0
        %864 = vmatpush2.msra.mxu0 0.0
        %865 = vmatprep.subr.mxu0 0.0
        %866 = vmatpush2.msra.mxu0 0.0
        %867 = vmatprep.mubr.f32.mxu0 0.0
        %868 = vmatmul.mubr.f32.gmra.mxu0 %v801
        %v869 = vpop.f32.mrf.mxu0
        %v870 = vadd.f32 0.0, %v869
        %v871 = vpop.f32.mrf.mxu0
        %872 = vdwg.mxu0
        %873 = vrot.lane.b32.xlu0 %v704, 120
        %v874 = vpop.permute.xlu0 %873
        %875 = vrot.lane.b32.xlu0 %v620, 120
        %v876 = vpop.permute.xlu0 %875
        %v877 = vsel %vm712, %v874, 0
        %v879 = vsel %vm712, %v876, 0
        %881 = vmatprep.subr.mxu0 0.0
        %882 = vmatpush1.xpose.msra.mxu0 0.0
        %883 = vmatprep.subr.mxu0 0.0
        %884 = vmatpush1.xpose.msra.mxu0 0.0
        %885 = vmatprep.subr.mxu0 0.0
        %886 = vmatpush1.xpose.msra.mxu0 0.0
        %887 = vmatprep.subr.mxu0 0.0
        %888 = vmatpush1.xpose.msra.mxu0 0.0
        %889 = vmatprep.subr.mxu0 0.0
        %890 = vmatpush1.xpose.msra.mxu0 0.0
        %891 = vmatprep.subr.mxu0 0.0
        %892 = vmatpush1.xpose.msra.mxu0 0.0
        %893 = vmatprep.subr.mxu0 0.0
        %894 = vmatpush1.xpose.msra.mxu0 0.0
        %895 = vmatprep.subr.mxu0 0.0
        %896 = vmatpush1.xpose.msra.mxu0 0.0
        %897 = vmatprep.subr.mxu0 0.0
        %898 = vmatpush1.xpose.msra.mxu0 0.0
        %899 = vmatprep.subr.mxu0 0.0
        %900 = vmatpush1.xpose.msra.mxu0 0.0
        %901 = vmatprep.subr.mxu0 0.0
        %902 = vmatpush1.xpose.msra.mxu0 0.0
        %903 = vmatprep.subr.mxu0 0.0
        %904 = vmatpush1.xpose.msra.mxu0 0.0
        %905 = vmatprep.subr.mxu0 0.0
        %906 = vmatpush1.xpose.msra.mxu0 0.0
        %907 = vmatprep.subr.mxu0 0.0
        %908 = vmatpush1.xpose.msra.mxu0 0.0
        %909 = vmatprep.subr.mxu0 0.0
        %910 = vmatpush1.xpose.msra.mxu0 0.0
        %911 = vmatprep.subr.mxu0 0.0
        %912 = vmatpush1.xpose.msra.mxu0 %v879
        %913 = vmatprep.subr.mxu0 0.0
        %914 = vmatpush2.xpose.msra.mxu0 0.0
        %915 = vmatprep.subr.mxu0 0.0
        %916 = vmatpush2.xpose.msra.mxu0 0.0
        %917 = vmatprep.subr.mxu0 0.0
        %918 = vmatpush2.xpose.msra.mxu0 0.0
        %919 = vmatprep.subr.mxu0 0.0
        %920 = vmatpush2.xpose.msra.mxu0 0.0
        %921 = vmatprep.subr.mxu0 0.0
        %922 = vmatpush2.xpose.msra.mxu0 0.0
        %923 = vmatprep.subr.mxu0 0.0
        %924 = vmatpush2.xpose.msra.mxu0 0.0
        %925 = vmatprep.subr.mxu0 0.0
        %926 = vmatpush2.xpose.msra.mxu0 0.0
        %927 = vmatprep.subr.mxu0 0.0
        %928 = vmatpush2.xpose.msra.mxu0 0.0
        %929 = vmatprep.subr.mxu0 0.0
        %930 = vmatpush2.xpose.msra.mxu0 0.0
        %931 = vmatprep.subr.mxu0 0.0
        %932 = vmatpush2.xpose.msra.mxu0 0.0
        %933 = vmatprep.subr.mxu0 0.0
        %934 = vmatpush2.xpose.msra.mxu0 0.0
        %935 = vmatprep.subr.mxu0 0.0
        %936 = vmatpush2.xpose.msra.mxu0 0.0
        %937 = vmatprep.subr.mxu0 0.0
        %938 = vmatpush2.xpose.msra.mxu0 0.0
        %939 = vmatprep.subr.mxu0 0.0
        %940 = vmatpush2.xpose.msra.mxu0 0.0
        %941 = vmatprep.subr.mxu0 0.0
        %942 = vmatpush2.xpose.msra.mxu0 0.0
        %943 = vmatprep.subr.mxu0 0.0
        %944 = vmatpush2.xpose.msra.mxu0 0.0
        %945 = vmatprep.mubr.f32.mxu0 0.0
        %946 = vmatmul.mubr.f32.gmra.mxu0 %v877
        %v947 = vpop.f32.mrf.mxu0
        %v948 = vadd.f32 %v710, %v947
        %v949 = vpop.f32.mrf.mxu0
        %950 = vdwg.mxu0
        %v951 = vsel %vm712, %v948, -inf
        %952 = vmax.xlane.f32.xlu0 %v951
        %v953 = vpop.xlane.xlu0 %952
        %v954 = vsub.f32 %v948, %v953
        %v955 = vmul.f32 %v954, 1.442695
        %v956 = vpow.pop %v955
        %v957 = vsel %vm712, %v956, 0.0
        %958 = vadd.xlane.f32.xlu0 %v957
        %v959 = vpop.xlane.xlu0 %958
        %v960 = vrcp.pop %v959
        %v961 = vmul.f32 %v956, %v960
        %963 = vrot.lane.b32.xlu0 %v701, 120
        %v964 = vpop.permute.xlu0 %963
        %v967 = vsel %vm712, %v961, 0
        %969 = vmatprep.subr.mxu0 0.0
        %970 = vmatpush1.msra.mxu0 0.0
        %971 = vmatprep.subr.mxu0 0.0
        %972 = vmatpush1.msra.mxu0 0.0
        %973 = vmatprep.subr.mxu0 0.0
        %974 = vmatpush1.msra.mxu0 0.0
        %975 = vmatprep.subr.mxu0 0.0
        %976 = vmatpush1.msra.mxu0 0.0
        %977 = vmatprep.subr.mxu0 0.0
        %978 = vmatpush1.msra.mxu0 0.0
        %979 = vmatprep.subr.mxu0 0.0
        %980 = vmatpush1.msra.mxu0 0.0
        %981 = vmatprep.subr.mxu0 0.0
        %982 = vmatpush1.msra.mxu0 0.0
        %983 = vmatprep.subr.mxu0 0.0
        %984 = vmatpush1.msra.mxu0 0.0
        %985 = vmatprep.subr.mxu0 0.0
        %986 = vmatpush1.msra.mxu0 0.0
        %987 = vmatprep.subr.mxu0 0.0
        %988 = vmatpush1.msra.mxu0 0.0
        %989 = vmatprep.subr.mxu0 0.0
        %990 = vmatpush1.msra.mxu0 0.0
        %991 = vmatprep.subr.mxu0 0.0
        %992 = vmatpush1.msra.mxu0 0.0
        %993 = vmatprep.subr.mxu0 0.0
        %994 = vmatpush1.msra.mxu0 0.0
        %995 = vmatprep.subr.mxu0 0.0
        %996 = vmatpush1.msra.mxu0 0.0
        %997 = vmatprep.subr.mxu0 0.0
        %998 = vmatpush1.msra.mxu0 0.0
        %999 = vmatprep.subr.mxu0 0.0
        %1000 = vmatpush1.msra.mxu0 %v964
        %1001 = vmatprep.subr.mxu0 0.0
        %1002 = vmatpush2.msra.mxu0 0.0
        %1003 = vmatprep.subr.mxu0 0.0
        %1004 = vmatpush2.msra.mxu0 0.0
        %1005 = vmatprep.subr.mxu0 0.0
        %1006 = vmatpush2.msra.mxu0 0.0
        %1007 = vmatprep.subr.mxu0 0.0
        %1008 = vmatpush2.msra.mxu0 0.0
        %1009 = vmatprep.subr.mxu0 0.0
        %1010 = vmatpush2.msra.mxu0 0.0
        %1011 = vmatprep.subr.mxu0 0.0
        %1012 = vmatpush2.msra.mxu0 0.0
        %1013 = vmatprep.subr.mxu0 0.0
        %1014 = vmatpush2.msra.mxu0 0.0
        %1015 = vmatprep.subr.mxu0 0.0
        %1016 = vmatpush2.msra.mxu0 0.0
        %1017 = vmatprep.subr.mxu0 0.0
        %1018 = vmatpush2.msra.mxu0 0.0
        %1019 = vmatprep.subr.mxu0 0.0
        %1020 = vmatpush2.msra.mxu0 0.0
        %1021 = vmatprep.subr.mxu0 0.0
        %1022 = vmatpush2.msra.mxu0 0.0
        %1023 = vmatprep.subr.mxu0 0.0
        %1024 = vmatpush2.msra.mxu0 0.0
        %1025 = vmatprep.subr.mxu0 0.0
        %1026 = vmatpush2.msra.mxu0 0.0
        %1027 = vmatprep.subr.mxu0 0.0
        %1028 = vmatpush2.msra.mxu0 0.0
        %1029 = vmatprep.subr.mxu0 0.0
        %1030 = vmatpush2.msra.mxu0 0.0
        %1031 = vmatprep.subr.mxu0 0.0
        %1032 = vmatpush2.msra.mxu0 0.0
        %1033 = vmatprep.mubr.f32.mxu0 0.0
        %1034 = vmatmul.mubr.f32.gmra.mxu0 %v967
        %v1035 = vpop.f32.mrf.mxu0
        %v1036 = vadd.f32 0.0, %v1035
        %v1037 = vpop.f32.mrf.mxu0
        %1038 = vdwg.mxu0
        %1039 = vrot.lane.b32.xlu0 %v704, 112
        %v1040 = vpop.permute.xlu0 %1039
        %1041 = vrot.lane.b32.xlu0 %v620, 112
        %v1042 = vpop.permute.xlu0 %1041
        %v1043 = vsel %vm712, %v1040, 0
        %v1045 = vsel %vm712, %v1042, 0
        %1047 = vmatprep.subr.mxu0 0.0
        %1048 = vmatpush1.xpose.msra.mxu0 0.0
        %1049 = vmatprep.subr.mxu0 0.0
        %1050 = vmatpush1.xpose.msra.mxu0 0.0
        %1051 = vmatprep.subr.mxu0 0.0
        %1052 = vmatpush1.xpose.msra.mxu0 0.0
        %1053 = vmatprep.subr.mxu0 0.0
        %1054 = vmatpush1.xpose.msra.mxu0 0.0
        %1055 = vmatprep.subr.mxu0 0.0
        %1056 = vmatpush1.xpose.msra.mxu0 0.0
        %1057 = vmatprep.subr.mxu0 0.0
        %1058 = vmatpush1.xpose.msra.mxu0 0.0
        %1059 = vmatprep.subr.mxu0 0.0
        %1060 = vmatpush1.xpose.msra.mxu0 0.0
        %1061 = vmatprep.subr.mxu0 0.0
        %1062 = vmatpush1.xpose.msra.mxu0 0.0
        %1063 = vmatprep.subr.mxu0 0.0
        %1064 = vmatpush1.xpose.msra.mxu0 0.0
        %1065 = vmatprep.subr.mxu0 0.0
        %1066 = vmatpush1.xpose.msra.mxu0 0.0
        %1067 = vmatprep.subr.mxu0 0.0
        %1068 = vmatpush1.xpose.msra.mxu0 0.0
        %1069 = vmatprep.subr.mxu0 0.0
        %1070 = vmatpush1.xpose.msra.mxu0 0.0
        %1071 = vmatprep.subr.mxu0 0.0
        %1072 = vmatpush1.xpose.msra.mxu0 0.0
        %1073 = vmatprep.subr.mxu0 0.0
        %1074 = vmatpush1.xpose.msra.mxu0 0.0
        %1075 = vmatprep.subr.mxu0 0.0
        %1076 = vmatpush1.xpose.msra.mxu0 0.0
        %1077 = vmatprep.subr.mxu0 0.0
        %1078 = vmatpush1.xpose.msra.mxu0 %v1045
        %1079 = vmatprep.subr.mxu0 0.0
        %1080 = vmatpush2.xpose.msra.mxu0 0.0
        %1081 = vmatprep.subr.mxu0 0.0
        %1082 = vmatpush2.xpose.msra.mxu0 0.0
        %1083 = vmatprep.subr.mxu0 0.0
        %1084 = vmatpush2.xpose.msra.mxu0 0.0
        %1085 = vmatprep.subr.mxu0 0.0
        %1086 = vmatpush2.xpose.msra.mxu0 0.0
        %1087 = vmatprep.subr.mxu0 0.0
        %1088 = vmatpush2.xpose.msra.mxu0 0.0
        %1089 = vmatprep.subr.mxu0 0.0
        %1090 = vmatpush2.xpose.msra.mxu0 0.0
        %1091 = vmatprep.subr.mxu0 0.0
        %1092 = vmatpush2.xpose.msra.mxu0 0.0
        %1093 = vmatprep.subr.mxu0 0.0
        %1094 = vmatpush2.xpose.msra.mxu0 0.0
        %1095 = vmatprep.subr.mxu0 0.0
        %1096 = vmatpush2.xpose.msra.mxu0 0.0
        %1097 = vmatprep.subr.mxu0 0.0
        %1098 = vmatpush2.xpose.msra.mxu0 0.0
        %1099 = vmatprep.subr.mxu0 0.0
        %1100 = vmatpush2.xpose.msra.mxu0 0.0
        %1101 = vmatprep.subr.mxu0 0.0
        %1102 = vmatpush2.xpose.msra.mxu0 0.0
        %1103 = vmatprep.subr.mxu0 0.0
        %1104 = vmatpush2.xpose.msra.mxu0 0.0
        %1105 = vmatprep.subr.mxu0 0.0
        %1106 = vmatpush2.xpose.msra.mxu0 0.0
        %1107 = vmatprep.subr.mxu0 0.0
        %1108 = vmatpush2.xpose.msra.mxu0 0.0
        %1109 = vmatprep.subr.mxu0 0.0
        %1110 = vmatpush2.xpose.msra.mxu0 0.0
        %1111 = vmatprep.mubr.f32.mxu0 0.0
        %1112 = vmatmul.mubr.f32.gmra.mxu0 %v1043
        %v1113 = vpop.f32.mrf.mxu0
        %v1114 = vadd.f32 %v710, %v1113
        %v1115 = vpop.f32.mrf.mxu0
        %1116 = vdwg.mxu0
        %v1117 = vsel %vm712, %v1114, -inf
        %1118 = vmax.xlane.f32.xlu0 %v1117
        %v1119 = vpop.xlane.xlu0 %1118
        %v1120 = vsub.f32 %v1114, %v1119
        %v1121 = vmul.f32 %v1120, 1.442695
        %v1122 = vpow.pop %v1121
        %v1123 = vsel %vm712, %v1122, 0.0
        %1124 = vadd.xlane.f32.xlu0 %v1123
        %v1125 = vpop.xlane.xlu0 %1124
        %v1126 = vrcp.pop %v1125
        %v1127 = vmul.f32 %v1122, %v1126
        %1128 = vrot.lane.b32.xlu0 %v701, 112
        %v1129 = vpop.permute.xlu0 %1128
        %v1132 = vsel %vm712, %v1127, 0
        %1134 = vmatprep.subr.mxu0 0.0
        %1135 = vmatpush1.msra.mxu0 0.0
        %1136 = vmatprep.subr.mxu0 0.0
        %1137 = vmatpush1.msra.mxu0 0.0
        %1138 = vmatprep.subr.mxu0 0.0
        %1139 = vmatpush1.msra.mxu0 0.0
        %1140 = vmatprep.subr.mxu0 0.0
        %1141 = vmatpush1.msra.mxu0 0.0
        %1142 = vmatprep.subr.mxu0 0.0
        %1143 = vmatpush1.msra.mxu0 0.0
        %1144 = vmatprep.subr.mxu0 0.0
        %1145 = vmatpush1.msra.mxu0 0.0
        %1146 = vmatprep.subr.mxu0 0.0
        %1147 = vmatpush1.msra.mxu0 0.0
        %1148 = vmatprep.subr.mxu0 0.0
        %1149 = vmatpush1.msra.mxu0 0.0
        %1150 = vmatprep.subr.mxu0 0.0
        %1151 = vmatpush1.msra.mxu0 0.0
        %1152 = vmatprep.subr.mxu0 0.0
        %1153 = vmatpush1.msra.mxu0 0.0
        %1154 = vmatprep.subr.mxu0 0.0
        %1155 = vmatpush1.msra.mxu0 0.0
        %1156 = vmatprep.subr.mxu0 0.0
        %1157 = vmatpush1.msra.mxu0 0.0
        %1158 = vmatprep.subr.mxu0 0.0
        %1159 = vmatpush1.msra.mxu0 0.0
        %1160 = vmatprep.subr.mxu0 0.0
        %1161 = vmatpush1.msra.mxu0 0.0
        %1162 = vmatprep.subr.mxu0 0.0
        %1163 = vmatpush1.msra.mxu0 0.0
        %1164 = vmatprep.subr.mxu0 0.0
        %1165 = vmatpush1.msra.mxu0 %v1129
        %1166 = vmatprep.subr.mxu0 0.0
        %1167 = vmatpush2.msra.mxu0 0.0
        %1168 = vmatprep.subr.mxu0 0.0
        %1169 = vmatpush2.msra.mxu0 0.0
        %1170 = vmatprep.subr.mxu0 0.0
        %1171 = vmatpush2.msra.mxu0 0.0
        %1172 = vmatprep.subr.mxu0 0.0
        %1173 = vmatpush2.msra.mxu0 0.0
        %1174 = vmatprep.subr.mxu0 0.0
        %1175 = vmatpush2.msra.mxu0 0.0
        %1176 = vmatprep.subr.mxu0 0.0
        %1177 = vmatpush2.msra.mxu0 0.0
        %1178 = vmatprep.subr.mxu0 0.0
        %1179 = vmatpush2.msra.mxu0 0.0
        %1180 = vmatprep.subr.mxu0 0.0
        %1181 = vmatpush2.msra.mxu0 0.0
        %1182 = vmatprep.subr.mxu0 0.0
        %1183 = vmatpush2.msra.mxu0 0.0
        %1184 = vmatprep.subr.mxu0 0.0
        %1185 = vmatpush2.msra.mxu0 0.0
        %1186 = vmatprep.subr.mxu0 0.0
        %1187 = vmatpush2.msra.mxu0 0.0
        %1188 = vmatprep.subr.mxu0 0.0
        %1189 = vmatpush2.msra.mxu0 0.0
        %1190 = vmatprep.subr.mxu0 0.0
        %1191 = vmatpush2.msra.mxu0 0.0
        %1192 = vmatprep.subr.mxu0 0.0
        %1193 = vmatpush2.msra.mxu0 0.0
        %1194 = vmatprep.subr.mxu0 0.0
        %1195 = vmatpush2.msra.mxu0 0.0
        %1196 = vmatprep.subr.mxu0 0.0
        %1197 = vmatpush2.msra.mxu0 0.0
        %1198 = vmatprep.mubr.f32.mxu0 0.0
        %1199 = vmatmul.mubr.f32.gmra.mxu0 %v1132
        %v1200 = vpop.f32.mrf.mxu0
        %v1201 = vadd.f32 0.0, %v1200
        %v1202 = vpop.f32.mrf.mxu0
        %1203 = vdwg.mxu0
        %1204 = vrot.lane.b32.xlu0 %v704, 104
        %v1205 = vpop.permute.xlu0 %1204
        %1206 = vrot.lane.b32.xlu0 %v620, 104
        %v1207 = vpop.permute.xlu0 %1206
        %v1208 = vsel %vm712, %v1205, 0
        %v1210 = vsel %vm712, %v1207, 0
        %1212 = vmatprep.subr.mxu0 0.0
        %1213 = vmatpush1.xpose.msra.mxu0 0.0
        %1214 = vmatprep.subr.mxu0 0.0
        %1215 = vmatpush1.xpose.msra.mxu0 0.0
        %1216 = vmatprep.subr.mxu0 0.0
        %1217 = vmatpush1.xpose.msra.mxu0 0.0
        %1218 = vmatprep.subr.mxu0 0.0
        %1219 = vmatpush1.xpose.msra.mxu0 0.0
        %1220 = vmatprep.subr.mxu0 0.0
        %1221 = vmatpush1.xpose.msra.mxu0 0.0
        %1222 = vmatprep.subr.mxu0 0.0
        %1223 = vmatpush1.xpose.msra.mxu0 0.0
        %1224 = vmatprep.subr.mxu0 0.0
        %1225 = vmatpush1.xpose.msra.mxu0 0.0
        %1226 = vmatprep.subr.mxu0 0.0
        %1227 = vmatpush1.xpose.msra.mxu0 0.0
        %1228 = vmatprep.subr.mxu0 0.0
        %1229 = vmatpush1.xpose.msra.mxu0 0.0
        %1230 = vmatprep.subr.mxu0 0.0
        %1231 = vmatpush1.xpose.msra.mxu0 0.0
        %1232 = vmatprep.subr.mxu0 0.0
        %1233 = vmatpush1.xpose.msra.mxu0 0.0
        %1234 = vmatprep.subr.mxu0 0.0
        %1235 = vmatpush1.xpose.msra.mxu0 0.0
        %1236 = vmatprep.subr.mxu0 0.0
        %1237 = vmatpush1.xpose.msra.mxu0 0.0
        %1238 = vmatprep.subr.mxu0 0.0
        %1239 = vmatpush1.xpose.msra.mxu0 0.0
        %1240 = vmatprep.subr.mxu0 0.0
        %1241 = vmatpush1.xpose.msra.mxu0 0.0
        %1242 = vmatprep.subr.mxu0 0.0
        %1243 = vmatpush1.xpose.msra.mxu0 %v1210
        %1244 = vmatprep.subr.mxu0 0.0
        %1245 = vmatpush2.xpose.msra.mxu0 0.0
        %1246 = vmatprep.subr.mxu0 0.0
        %1247 = vmatpush2.xpose.msra.mxu0 0.0
        %1248 = vmatprep.subr.mxu0 0.0
        %1249 = vmatpush2.xpose.msra.mxu0 0.0
        %1250 = vmatprep.subr.mxu0 0.0
        %1251 = vmatpush2.xpose.msra.mxu0 0.0
        %1252 = vmatprep.subr.mxu0 0.0
        %1253 = vmatpush2.xpose.msra.mxu0 0.0
        %1254 = vmatprep.subr.mxu0 0.0
        %1255 = vmatpush2.xpose.msra.mxu0 0.0
        %1256 = vmatprep.subr.mxu0 0.0
        %1257 = vmatpush2.xpose.msra.mxu0 0.0
        %1258 = vmatprep.subr.mxu0 0.0
        %1259 = vmatpush2.xpose.msra.mxu0 0.0
        %1260 = vmatprep.subr.mxu0 0.0
        %1261 = vmatpush2.xpose.msra.mxu0 0.0
        %1262 = vmatprep.subr.mxu0 0.0
        %1263 = vmatpush2.xpose.msra.mxu0 0.0
        %1264 = vmatprep.subr.mxu0 0.0
        %1265 = vmatpush2.xpose.msra.mxu0 0.0
        %1266 = vmatprep.subr.mxu0 0.0
        %1267 = vmatpush2.xpose.msra.mxu0 0.0
        %1268 = vmatprep.subr.mxu0 0.0
        %1269 = vmatpush2.xpose.msra.mxu0 0.0
        %1270 = vmatprep.subr.mxu0 0.0
        %1271 = vmatpush2.xpose.msra.mxu0 0.0
        %1272 = vmatprep.subr.mxu0 0.0
        %1273 = vmatpush2.xpose.msra.mxu0 0.0
        %1274 = vmatprep.subr.mxu0 0.0
        %1275 = vmatpush2.xpose.msra.mxu0 0.0
        %1276 = vmatprep.mubr.f32.mxu0 0.0
        %1277 = vmatmul.mubr.f32.gmra.mxu0 %v1208
        %v1278 = vpop.f32.mrf.mxu0
        %v1279 = vadd.f32 %v710, %v1278
        %v1280 = vpop.f32.mrf.mxu0
        %1281 = vdwg.mxu0
        %v1282 = vsel %vm712, %v1279, -inf
        %1283 = vmax.xlane.f32.xlu0 %v1282
        %v1284 = vpop.xlane.xlu0 %1283
        %v1285 = vsub.f32 %v1279, %v1284
        %v1286 = vmul.f32 %v1285, 1.442695
        %v1287 = vpow.pop %v1286
        %v1288 = vsel %vm712, %v1287, 0.0
        %1289 = vadd.xlane.f32.xlu0 %v1288
        %v1290 = vpop.xlane.xlu0 %1289
        %v1291 = vrcp.pop %v1290
        %v1292 = vmul.f32 %v1287, %v1291
        %1293 = vrot.lane.b32.xlu0 %v701, 104
        %v1294 = vpop.permute.xlu0 %1293
        %v1297 = vsel %vm712, %v1292, 0
        %1299 = vmatprep.subr.mxu0 0.0
        %1300 = vmatpush1.msra.mxu0 0.0
        %1301 = vmatprep.subr.mxu0 0.0
        %1302 = vmatpush1.msra.mxu0 0.0
        %1303 = vmatprep.subr.mxu0 0.0
        %1304 = vmatpush1.msra.mxu0 0.0
        %1305 = vmatprep.subr.mxu0 0.0
        %1306 = vmatpush1.msra.mxu0 0.0
        %1307 = vmatprep.subr.mxu0 0.0
        %1308 = vmatpush1.msra.mxu0 0.0
        %1309 = vmatprep.subr.mxu0 0.0
        %1310 = vmatpush1.msra.mxu0 0.0
        %1311 = vmatprep.subr.mxu0 0.0
        %1312 = vmatpush1.msra.mxu0 0.0
        %1313 = vmatprep.subr.mxu0 0.0
        %1314 = vmatpush1.msra.mxu0 0.0
        %1315 = vmatprep.subr.mxu0 0.0
        %1316 = vmatpush1.msra.mxu0 0.0
        %1317 = vmatprep.subr.mxu0 0.0
        %1318 = vmatpush1.msra.mxu0 0.0
        %1319 = vmatprep.subr.mxu0 0.0
        %1320 = vmatpush1.msra.mxu0 0.0
        %1321 = vmatprep.subr.mxu0 0.0
        %1322 = vmatpush1.msra.mxu0 0.0
        %1323 = vmatprep.subr.mxu0 0.0
        %1324 = vmatpush1.msra.mxu0 0.0
        %1325 = vmatprep.subr.mxu0 0.0
        %1326 = vmatpush1.msra.mxu0 0.0
        %1327 = vmatprep.subr.mxu0 0.0
        %1328 = vmatpush1.msra.mxu0 0.0
        %1329 = vmatprep.subr.mxu0 0.0
        %1330 = vmatpush1.msra.mxu0 %v1294
        %1331 = vmatprep.subr.mxu0 0.0
        %1332 = vmatpush2.msra.mxu0 0.0
        %1333 = vmatprep.subr.mxu0 0.0
        %1334 = vmatpush2.msra.mxu0 0.0
        %1335 = vmatprep.subr.mxu0 0.0
        %1336 = vmatpush2.msra.mxu0 0.0
        %1337 = vmatprep.subr.mxu0 0.0
        %1338 = vmatpush2.msra.mxu0 0.0
        %1339 = vmatprep.subr.mxu0 0.0
        %1340 = vmatpush2.msra.mxu0 0.0
        %1341 = vmatprep.subr.mxu0 0.0
        %1342 = vmatpush2.msra.mxu0 0.0
        %1343 = vmatprep.subr.mxu0 0.0
        %1344 = vmatpush2.msra.mxu0 0.0
        %1345 = vmatprep.subr.mxu0 0.0
        %1346 = vmatpush2.msra.mxu0 0.0
        %1347 = vmatprep.subr.mxu0 0.0
        %1348 = vmatpush2.msra.mxu0 0.0
        %1349 = vmatprep.subr.mxu0 0.0
        %1350 = vmatpush2.msra.mxu0 0.0
        %1351 = vmatprep.subr.mxu0 0.0
        %1352 = vmatpush2.msra.mxu0 0.0
        %1353 = vmatprep.subr.mxu0 0.0
        %1354 = vmatpush2.msra.mxu0 0.0
        %1355 = vmatprep.subr.mxu0 0.0
        %1356 = vmatpush2.msra.mxu0 0.0
        %1357 = vmatprep.subr.mxu0 0.0
        %1358 = vmatpush2.msra.mxu0 0.0
        %1359 = vmatprep.subr.mxu0 0.0
        %1360 = vmatpush2.msra.mxu0 0.0
        %1361 = vmatprep.subr.mxu0 0.0
        %1362 = vmatpush2.msra.mxu0 0.0
        %1363 = vmatprep.mubr.f32.mxu0 0.0
        %1364 = vmatmul.mubr.f32.gmra.mxu0 %v1297
        %v1365 = vpop.f32.mrf.mxu0
        %v1366 = vadd.f32 0.0, %v1365
        %v1367 = vpop.f32.mrf.mxu0
        %1368 = vdwg.mxu0
        %1370 = vrot.lane.b32.xlu0 %v1036, 8
        %v1371 = vpop.permute.xlu0 %1370
        %1374 = vrot.lane.b32.xlu0 %v1201, 16
        %v1375 = vpop.permute.xlu0 %1374
        %1378 = vrot.lane.b32.xlu0 %v1366, 24
        %v1379 = vpop.permute.xlu0 %1378
        %v1381 = vsel %vm712, %v870, %v1371
        %vm1382 = vcmask 130048
        %v1383 = vsel %vm1382, %v1381, %v1375
        %vm1384 = vcmask 195584
        %v1385 = vsel %vm1384, %v1383, %v1379
        %1386 = vst.msk [vmem:[%s443] sm:$0xff] %vm468, %v1385
        %s1387 = sand.u32 %s257, 1
        %s1388 = scalar_lea.sflag [#allocation4], %s1387
        %s1389 = sand.u32 %s257, 1
        %s1390 = smul.addr %s1389, 8
        %s1391 = scalar_lea.vmem [#allocation10], %s1390
        // Predicated region
        $region69: #{tpu_custom_call.1} parent=51 // pred_check
          %p1392 = pneg %p267
        $region70: #{tpu_custom_call.1} parent=51 // pred_check_branch
          %1394 = sbr.rel (%p1392) target = $region72
        $region71: #{tpu_custom_call.1} parent=51 // pred_region
          %s1396 = ssub.s32 128, 128
          %1397 = vsyncadd %s1388, %s1396
          %s1398 = sadd.s32 %s32, %s31
          %s1399 = smul.addr %s1398, 128
          %s1400 = scalar_lea.hbm %s8, %s1399
          %s1402 = sshll.u32 %s1391, 4
          %s1403 = int_to_ptr.vmem [resolvable:$true] %s1402
          %1405 = dma.vmem_to_hbm [thread:$0]  %s1403, 128, %s1400, %s1388
        $region72: #{tpu_custom_call.1} parent=51 // pred_fallthru
          _
      $region52: #{tpu_custom_call.1} parent=5 // pred_fallthru
        _
      %p1406 = scmp.le.s32.totalorder 2, %s22
      // Predicated region
      $region73: #{tpu_custom_call.1} parent=5 // pred_check
        %p1407 = pneg %p1406
      $region74: #{tpu_custom_call.1} parent=5 // pred_check_branch
        %1409 = sbr.rel (%p1407) target = $region76
      $region75: #{tpu_custom_call.1} parent=5 // pred_region
        %s1410 = ssub.s32 %s22, 2
        // Predicated region
        $region77: #{tpu_custom_call.1} parent=75 // pred_check
          %p1411 = pneg %p273
        $region78: #{tpu_custom_call.1} parent=75 // pred_check_branch
          %1413 = sbr.rel (%p1411) target = $region80
        $region79: #{tpu_custom_call.1} parent=75 // pred_region
          %s1414 = sand.u32 %s258, 1
          %s1415 = scalar_lea.sflag [#allocation4], %s1414
          %s1416 = sand.u32 %s258, 1
          %s1417 = smul.addr %s1416, 8
          %s1418 = scalar_lea.vmem [#allocation10], %s1417
          %1419 = dma.done %s1415, 128
        $region80: #{tpu_custom_call.1} parent=75 // pred_fallthru
          _
      $region76: #{tpu_custom_call.1} parent=5 // pred_fallthru
        _
    $region6: #{tpu_custom_call.1} parent=1 // loop_footer
      %s26 = sadd.s32 1, %s22
    $region7: #{tpu_custom_call.1} parent=1 // loop_footer_branch
      %21 = sbr.rel target = $region3
    $region8: #{tpu_custom_call.1} parent=1 // loop_exit
      _
    %1420 = vsyncpa [#allocation3], 1
    %s1421 = scalar_lea.sflag [#allocation3], 1
    %1422 = vsyncpa %s1421, 1
    %1423 = vsyncpa [#allocation6], 1
    %1424 = vsyncpa [#allocation9], 1
    %1425 = vsyncpa [#allocation4], 1
    %s1426 = scalar_lea.sflag [#allocation4], 1
    %1427 = vsyncpa %s1426, 1

</llo_original>
